<compile_context>
chip_gen: v7x
topology: tpu7x:2x2x1
jax: 0.10.0
libtpu: 0.0.40
codegen_flags: <defaults>
</compile_context>

<pallas_src>
import functools

import jax
import jax.numpy as jnp
from jax.experimental import pallas as pl
from jax.experimental.pallas import tpu as pltpu


# ----------------------------------------------------------------------------
# Kernel: one grid step == one Decoder.forward timestep
# ----------------------------------------------------------------------------
def _make_decoder_kernel(n_layers: int, H: int):
    def kernel(*refs):
        emb_ref, hid0_ref, enc_ref, w_att_ref = refs[0:4]
        idx = 4
        gru_refs = []
        for _ in range(n_layers):
            gru_refs.append(refs[idx:idx + 3])     # (w_ih, w_hh, b_stack)
            idx += 3
        vf_ref, cf_ref = refs[idx], refs[idx + 1]
        pred_ref, hid_ref = refs[idx + 2], refs[idx + 3]   # outputs
        attn_ref = refs[idx + 4]                           # VMEM scratch [B, H]

        t = pl.program_id(0)

        @pl.when(t == 0)
        def _init():
            # Hidden state is carried in the resident output block.
            hid_ref[...] = hid0_ref[...]
            # Attention is mathematically step-invariant for this module (the
            # z-dependent term is constant over the sequence axis and cancels
            # inside the softmax) -> compute the context vector once.
            enc = enc_ref[...]                                    # [B, S, H]
            scores = jnp.sum(enc * w_att_ref[...], axis=-1)       # [B, S]
            scores = scores - jnp.max(scores, axis=1, keepdims=True)
            e = jnp.exp(scores)
            p = e / jnp.sum(e, axis=1, keepdims=True)             # exact softmax
            attn_ref[...] = jnp.sum(p[:, :, None] * enc, axis=1)  # [B, H]

        emb = emb_ref[0]            # [B, E]  (this step's token embedding)
        attn = attn_ref[...]        # [B, H]

        # ---------------- one-timestep multi-layer GRU (exact PyTorch math) ---
        x = emb
        for l in range(n_layers):
            w_ih_ref, w_hh_ref, b_ref = gru_refs[l]
            h_prev = hid_ref[l] + attn                            # hidden[i] += attn
            gi = jnp.dot(x, w_ih_ref[...],
                         preferred_element_type=jnp.float32) + b_ref[0:1]
            gh = jnp.dot(h_prev, w_hh_ref[...],
                         preferred_element_type=jnp.float32) + b_ref[1:2]
            r = jax.nn.sigmoid(gi[:, 0:H] + gh[:, 0:H])
            zg = jax.nn.sigmoid(gi[:, H:2 * H] + gh[:, H:2 * H])
            n = jnp.tanh(gi[:, 2 * H:3 * H] + r * gh[:, 2 * H:3 * H])
            h_new = (1.0 - zg) * n + zg * h_prev
            hid_ref[l] = h_new
            x = h_new                                             # feeds next layer

        # ---------------- embedding2vocab 1/2/3 folded into one matmul --------
        pred_ref[0] = (jnp.dot(x, vf_ref[...],
                               preferred_element_type=jnp.float32)
                       + cf_ref[...])

    return kernel


# ----------------------------------------------------------------------------
# Parameter folding — run ONCE when parameters are loaded (not per step)
# ----------------------------------------------------------------------------
def fold_decoder_params(params, *, n_layers, H):
    """Algebraic folding of the activation-free Linear chains.

    Valid because match_nn and embedding2vocab1/2/3 contain no nonlinearity.
    Call once at parameter-load / update time and reuse the result for the
    whole decode (hoisted out of the per-step path per the perf review).
    """
    hp = jax.lax.Precision.HIGHEST
    f = {'emb_table': params['emb_table']}

    # Attention: alpha = cat(h, z) @ (W1 @ W2 @ W3^T) + b.  Only the h
    # (encoder) half matters for the softmaxed weights — the z half and the
    # bias are constant over the sequence axis and cancel in the softmax.
    w12 = jnp.dot(params['aw1'], params['aw2'], precision=hp)            # [2H, 2H]
    w_att = jnp.dot(w12, params['aw3'].T, precision=hp)                  # [2H, 1]
    f['w_att_enc'] = w_att[:H].reshape(1, H)

    # GRU weights stay f32 and un-fused (two exact dots per layer in-kernel);
    # the two bias rows are stacked so each layer ships one [2, 3H] operand.
    for l in range(n_layers):
        f[f'w_ih_{l}'] = params[f'w_ih_{l}']
        f[f'w_hh_{l}'] = params[f'w_hh_{l}']
        f[f'b_{l}'] = jnp.concatenate(
            [params[f'b_ih_{l}'], params[f'b_hh_{l}']], axis=0)          # [2, 3H]

    # embedding2vocab: pred = ((x@V1+c1)@V2+c2)@V3+c3 == x @ v_fold + c_fold
    v12 = jnp.dot(params['v1'], params['v2'], precision=hp)              # [H, 4H]
    f['v_fold'] = jnp.dot(v12, params['v3'], precision=hp)               # [H, V]
    f['c_fold'] = (jnp.dot(jnp.dot(params['c1'], params['v2'], precision=hp)
                           + params['c2'], params['v3'], precision=hp)
                   + params['c3'])                                       # [1, V]
    return f


# ----------------------------------------------------------------------------
# Wrapper: T decode steps in one pallas_call (grid over timesteps)
# ----------------------------------------------------------------------------
def decoder_decode(token_ids, hidden, encoder_outputs, folded,
                   *, n_layers, H, vocab_size):
    """token_ids [T, B] int32, hidden [L, B, H], encoder_outputs [B, S, H].

    Returns (predictions [T, B, V], final hidden [L, B, H]).  Each grid step
    reproduces exactly one forward() of the PyTorch Decoder; T == 1 is the
    plain single-step forward.
    """
    T, B = token_ids.shape
    S = encoder_outputs.shape[1]
    E = folded['emb_table'].shape[1]

    # One XLA gather for all T steps (off the per-step path); dropout = identity.
    emb_seq = folded['emb_table'][token_ids]                             # [T, B, E]

    args = [emb_seq, hidden, encoder_outputs, folded['w_att_enc']]
    for l in range(n_layers):
        args += [folded[f'w_ih_{l}'], folded[f'w_hh_{l}'], folded[f'b_{l}']]
    args += [folded['v_fold'], folded['c_fold']]

    def const_spec(shape):
        n = len(shape)
        return pl.BlockSpec(shape, lambda t, _n=n: (0,) * _n)

    in_specs = [pl.BlockSpec((1, B, E), lambda t: (t, 0, 0)),   # this step's embedding
                const_spec((n_layers, B, H)),                   # initial hidden
                const_spec((B, S, H)),                          # encoder outputs (resident)
                const_spec((1, H))]                             # folded attention vector
    for l in range(n_layers):
        e_in = E if l == 0 else H
        in_specs += [const_spec((e_in, 3 * H)),                 # W_ih (resident)
                     const_spec((H, 3 * H)),                    # W_hh (resident)
                     const_spec((2, 3 * H))]                    # [b_ih; b_hh]
    in_specs += [const_spec((H, vocab_size)),                   # folded vocab weight
                 const_spec((1, vocab_size))]                   # folded vocab bias

    out_specs = (pl.BlockSpec((1, B, vocab_size), lambda t: (t, 0, 0)),
                 pl.BlockSpec((n_layers, B, H), lambda t: (0, 0, 0)))   # resident carry

    grid_spec = pltpu.PrefetchScalarGridSpec(
        num_scalar_prefetch=0,
        grid=(T,),
        in_specs=in_specs,
        out_specs=out_specs,
        scratch_shapes=[pltpu.VMEM((B, H), jnp.float32)],       # cached context vector
    )

    preds, hid_out = pl.pallas_call(
        _make_decoder_kernel(n_layers, H),
        out_shape=(jax.ShapeDtypeStruct((T, B, vocab_size), jnp.float32),
                   jax.ShapeDtypeStruct((n_layers, B, H), jnp.float32)),
        grid_spec=grid_spec,
        compiler_params=pltpu.CompilerParams(
            dimension_semantics=("arbitrary",)),
    )(*args)
    return preds, hid_out


def decoder_forward(input_ids, hidden, encoder_outputs, folded,
                    *, n_layers, H, vocab_size):
    """Single-step forward matching the PyTorch module signature."""
    preds, hid_out = decoder_decode(input_ids[None, :], hidden, encoder_outputs,
                                    folded, n_layers=n_layers, H=H,
                                    vocab_size=vocab_size)
    return preds[0], hid_out


# ----------------------------------------------------------------------------
# Pure-JAX reference (unfused, f32, full attention incl. z & biases)
# ----------------------------------------------------------------------------
def _reference_step(emb, hidden, enc, params, *, n_layers, H):
    hp = jax.lax.Precision.HIGHEST
    B, S, _ = enc.shape
    z = hidden[-1]
    hz = jnp.concatenate([enc, jnp.broadcast_to(z[:, None, :], (B, S, H))], axis=-1)
    a1 = jnp.einsum('bsi,io->bso', hz, params['aw1'], precision=hp) + params['ab1']
    a2 = jnp.einsum('bsi,io->bso', a1, params['aw2'], precision=hp) + params['ab2']
    alpha = jnp.sum(a2 * params['aw3'], axis=-1) + params['ab3']
    p = jax.nn.softmax(alpha, axis=1)
    attn = jnp.sum(p[:, :, None] * enc, axis=1)

    x = emb
    new_hidden = []
    for l in range(n_layers):
        h_prev = hidden[l] + attn
        gi = jnp.dot(x, params[f'w_ih_{l}'], precision=hp) + params[f'b_ih_{l}']
        gh = jnp.dot(h_prev, params[f'w_hh_{l}'], precision=hp) + params[f'b_hh_{l}']
        r = jax.nn.sigmoid(gi[:, :H] + gh[:, :H])
        zg = jax.nn.sigmoid(gi[:, H:2 * H] + gh[:, H:2 * H])
        n = jnp.tanh(gi[:, 2 * H:] + r * gh[:, 2 * H:])
        h_new = (1.0 - zg) * n + zg * h_prev
        new_hidden.append(h_new)
        x = h_new

    o1 = jnp.dot(x, params['v1'], precision=hp) + params['c1']
    o2 = jnp.dot(o1, params['v2'], precision=hp) + params['c2']
    pred = jnp.dot(o2, params['v3'], precision=hp) + params['c3']
    return pred, jnp.stack(new_hidden)


def decoder_reference_decode(token_ids, hidden, enc, params, *, n_layers, H):
    preds = []
    for t in range(token_ids.shape[0]):
        emb = params['emb_table'][token_ids[t]]
        pred, hidden = _reference_step(emb, hidden, enc, params,
                                       n_layers=n_layers, H=H)
        preds.append(pred)
    return jnp.stack(preds), hidden


# ----------------------------------------------------------------------------
# Deterministic parameter init + driver
# ----------------------------------------------------------------------------
def init_params(key, *, vocab_size, emb_dim, H, n_layers):
    def lin(k, fan_in, shape):
        return jax.random.normal(k, shape, jnp.float32) / jnp.sqrt(fan_in)

    keys = iter(jax.random.split(key, 64))
    p = {}
    p['emb_table'] = jax.random.normal(next(keys), (vocab_size, emb_dim), jnp.float32)

    # Attention.match_nn: Linear(2H,4H) -> Linear(4H,2H) -> Linear(2H,1)
    p['aw1'] = lin(next(keys), 2 * H, (2 * H, 4 * H)); p['ab1'] = lin(next(keys), 2 * H, (1, 4 * H))
    p['aw2'] = lin(next(keys), 4 * H, (4 * H, 2 * H)); p['ab2'] = lin(next(keys), 4 * H, (1, 2 * H))
    p['aw3'] = lin(next(keys), 2 * H, (1, 2 * H));     p['ab3'] = lin(next(keys), 2 * H, (1, 1))

    # GRU, gate order (r, z, n) as in PyTorch, weights stored [in, 3H]
    for l in range(n_layers):
        in_dim = emb_dim if l == 0 else H
        p[f'w_ih_{l}'] = lin(next(keys), in_dim, (in_dim, 3 * H))
        p[f'w_hh_{l}'] = lin(next(keys), H, (H, 3 * H))
        p[f'b_ih_{l}'] = lin(next(keys), H, (1, 3 * H))
        p[f'b_hh_{l}'] = lin(next(keys), H, (1, 3 * H))

    # embedding2vocab 1/2/3
    p['v1'] = lin(next(keys), H, (H, 2 * H));           p['c1'] = lin(next(keys), H, (1, 2 * H))
    p['v2'] = lin(next(keys), 2 * H, (2 * H, 4 * H));   p['c2'] = lin(next(keys), 2 * H, (1, 4 * H))
    p['v3'] = lin(next(keys), 4 * H, (4 * H, vocab_size))
    p['c3'] = lin(next(keys), 4 * H, (1, vocab_size))
    return p


if __name__ == "__main__":
    # Module config: Decoder(cn_vocab_size, emb_dim, hid_dim, n_layers, dropout, isatt=True)
    cn_vocab_size = 256
    emb_dim = 32
    enc_hid_dim = 64
    H = enc_hid_dim * 2          # decoder hid_dim = hid_dim * 2 = 128
    n_layers = 2
    B, S, T = 8, 8, 5            # B=8 fills all f32 sublanes; T decode steps per call

    key = jax.random.PRNGKey(0)
    k_params, k_in, k_hid, k_enc = jax.random.split(key, 4)

    params = init_params(k_params, vocab_size=cn_vocab_size, emb_dim=emb_dim,
                         H=H, n_layers=n_layers)

    token_ids = jax.random.randint(k_in, (T, B), 0, cn_vocab_size, jnp.int32)
    hidden0 = jax.random.normal(k_hid, (n_layers, B, H), jnp.float32)
    encoder_outputs = jax.random.normal(k_enc, (B, S, H), jnp.float32)

    # Fold once at parameter-load time (hoisted out of the decode path).
    folded = fold_decoder_params(params, n_layers=n_layers, H=H)
    folded = jax.block_until_ready(folded)

    decode = jax.jit(functools.partial(decoder_decode, n_layers=n_layers, H=H,
                                       vocab_size=cn_vocab_size))
    preds, hid_final = decode(token_ids, hidden0, encoder_outputs, folded)
    jax.block_until_ready((preds, hid_final))

    # Single-step API (== the module's forward signature) as well.
    step = jax.jit(functools.partial(decoder_forward, n_layers=n_layers, H=H,
                                     vocab_size=cn_vocab_size))
    pred1, hid1 = step(token_ids[0], hidden0, encoder_outputs, folded)
    jax.block_until_ready((pred1, hid1))

    # Pure-JAX reference: T applications of the unfolded per-step module math.
    preds_ref, hid_ref_final = decoder_reference_decode(
        token_ids, hidden0, encoder_outputs, params, n_layers=n_layers, H=H)
    pred1_ref, hid1_ref = _reference_step(
        params['emb_table'][token_ids[0]], hidden0, encoder_outputs, params,
        n_layers=n_layers, H=H)

    assert preds.shape == (T, B, cn_vocab_size)
    assert hid_final.shape == (n_layers, B, H)
    assert jnp.allclose(preds, preds_ref, atol=5e-3, rtol=5e-3)
    assert jnp.allclose(hid_final, hid_ref_final, atol=5e-3, rtol=5e-3)
    assert jnp.allclose(pred1, pred1_ref, atol=5e-3, rtol=5e-3)
    assert jnp.allclose(hid1, hid1_ref, atol=5e-3, rtol=5e-3)

    print("KERNEL_OK")
</pallas_src>

<mosaic_0001>
module attributes {stable_mosaic.version = 11 : i64} {
  func.func @kernel(%arg0: i32, %arg1: memref<1x8x32xf32, #tpu.memory_space<vmem>>, %arg2: memref<2x8x128xf32, #tpu.memory_space<vmem>>, %arg3: memref<8x8x128xf32, #tpu.memory_space<vmem>>, %arg4: memref<1x128xf32, #tpu.memory_space<vmem>>, %arg5: memref<32x384xf32, #tpu.memory_space<vmem>>, %arg6: memref<128x384xf32, #tpu.memory_space<vmem>>, %arg7: memref<2x384xf32, #tpu.memory_space<vmem>>, %arg8: memref<128x384xf32, #tpu.memory_space<vmem>>, %arg9: memref<128x384xf32, #tpu.memory_space<vmem>>, %arg10: memref<2x384xf32, #tpu.memory_space<vmem>>, %arg11: memref<128x256xf32, #tpu.memory_space<vmem>>, %arg12: memref<1x256xf32, #tpu.memory_space<vmem>>, %arg13: memref<1x8x256xf32, #tpu.memory_space<vmem>>, %arg14: memref<2x8x128xf32, #tpu.memory_space<vmem>>, %arg15: memref<8x128xf32, #tpu.memory_space<vmem>>) attributes {dimension_semantics = [#tpu.dimension_semantics<arbitrary>], iteration_bounds = array<i64: 5>, scalar_prefetch = 0 : i64, scratch_operands = 1 : i64, tpu.core_type = #tpu.core_type<tc>, window_params = [{transform_indices = @transform_0, window_bounds = array<i64: 1, 8, 32>}, {pipeline_mode = #tpu.pipeline_mode<synchronous>, transform_indices = @transform_1, window_bounds = array<i64: 2, 8, 128>}, {pipeline_mode = #tpu.pipeline_mode<synchronous>, transform_indices = @transform_2, window_bounds = array<i64: 8, 8, 128>}, {pipeline_mode = #tpu.pipeline_mode<synchronous>, transform_indices = @transform_3, window_bounds = array<i64: 1, 128>}, {pipeline_mode = #tpu.pipeline_mode<synchronous>, transform_indices = @transform_4, window_bounds = array<i64: 32, 384>}, {pipeline_mode = #tpu.pipeline_mode<synchronous>, transform_indices = @transform_5, window_bounds = array<i64: 128, 384>}, {pipeline_mode = #tpu.pipeline_mode<synchronous>, transform_indices = @transform_6, window_bounds = array<i64: 2, 384>}, {pipeline_mode = #tpu.pipeline_mode<synchronous>, transform_indices = @transform_7, window_bounds = array<i64: 128, 384>}, {pipeline_mode = #tpu.pipeline_mode<synchronous>, transform_indices = @transform_8, window_bounds = array<i64: 128, 384>}, {pipeline_mode = #tpu.pipeline_mode<synchronous>, transform_indices = @transform_9, window_bounds = array<i64: 2, 384>}, {pipeline_mode = #tpu.pipeline_mode<synchronous>, transform_indices = @transform_10, window_bounds = array<i64: 128, 256>}, {pipeline_mode = #tpu.pipeline_mode<synchronous>, transform_indices = @transform_11, window_bounds = array<i64: 1, 256>}, {transform_indices = @transform_12, window_bounds = array<i64: 1, 8, 256>}, {pipeline_mode = #tpu.pipeline_mode<synchronous>, transform_indices = @transform_13, window_bounds = array<i64: 2, 8, 128>}]} {
    %c0_i32 = arith.constant 0 : i32
    %0 = arith.cmpi eq, %arg0, %c0_i32 : i32
    %1 = arith.extui %0 : i1 to i32
    %c0_i32_0 = arith.constant 0 : i32
    %2 = arith.cmpi ne, %1, %c0_i32_0 : i32
    scf.if %2 {
      %c0_49 = arith.constant 0 : index
      %c0_50 = arith.constant 0 : index
      %c0_51 = arith.constant 0 : index
      %98 = vector.load %arg2[%c0_49, %c0_50, %c0_51] : memref<2x8x128xf32, #tpu.memory_space<vmem>>, vector<2x8x128xf32>
      %c0_52 = arith.constant 0 : index
      %c0_53 = arith.constant 0 : index
      %c0_54 = arith.constant 0 : index
      %99 = vector.load %arg14[%c0_52, %c0_53, %c0_54] : memref<2x8x128xf32, #tpu.memory_space<vmem>>, vector<2x8x128xf32>
      tpu.vector_store %arg14[%c0_52, %c0_53, %c0_54], %98 {strides = array<i32>} : memref<2x8x128xf32, #tpu.memory_space<vmem>>, vector<2x8x128xf32>,
      %c0_55 = arith.constant 0 : index
      %c0_56 = arith.constant 0 : index
      %c0_57 = arith.constant 0 : index
      %100 = vector.load %arg3[%c0_55, %c0_56, %c0_57] : memref<8x8x128xf32, #tpu.memory_space<vmem>>, vector<8x8x128xf32>
      %c0_58 = arith.constant 0 : index
      %c0_59 = arith.constant 0 : index
      %101 = vector.load %arg4[%c0_58, %c0_59] : memref<1x128xf32, #tpu.memory_space<vmem>>, vector<1x128xf32>
      %102 = vector.shape_cast %101 : vector<1x128xf32> to vector<1x1x128xf32>
      %103 = vector.broadcast %102 : vector<1x1x128xf32> to vector<8x8x128xf32>
      %104 = arith.mulf %100, %103 : vector<8x8x128xf32>
      %cst_60 = arith.constant dense<0.000000e+00> : vector<8x8xf32>
      %105 = vector.multi_reduction <add>, %104, %cst_60 [2] : vector<8x8x128xf32> to vector<8x8xf32>
      %cst_61 = arith.constant dense<0xFF800000> : vector<8xf32>
      %106 = vector.multi_reduction <maximumf>, %105, %cst_61 [1] : vector<8x8xf32> to vector<8xf32>
      %107 = vector.shape_cast %106 : vector<8xf32> to vector<8x1xf32>
      %108 = vector.broadcast %107 : vector<8x1xf32> to vector<8x8xf32>
      %109 = arith.subf %105, %108 : vector<8x8xf32>
      %110 = math.exp %109 : vector<8x8xf32>
      %cst_62 = arith.constant dense<0.000000e+00> : vector<8xf32>
      %111 = vector.multi_reduction <add>, %110, %cst_62 [1] : vector<8x8xf32> to vector<8xf32>
      %112 = vector.shape_cast %111 : vector<8xf32> to vector<8x1xf32>
      %113 = vector.broadcast %112 : vector<8x1xf32> to vector<8x8xf32>
      %114 = arith.divf %110, %113 : vector<8x8xf32>
      %115 = vector.shape_cast %114 : vector<8x8xf32> to vector<8x8x1xf32>
      %116 = vector.broadcast %115 : vector<8x8x1xf32> to vector<8x8x128xf32>
      %117 = arith.mulf %116, %100 : vector<8x8x128xf32>
      %cst_63 = arith.constant dense<0.000000e+00> : vector<8x128xf32>
      %118 = vector.multi_reduction <add>, %117, %cst_63 [1] : vector<8x8x128xf32> to vector<8x128xf32>
      %c0_64 = arith.constant 0 : index
      %c0_65 = arith.constant 0 : index
      %119 = vector.load %arg15[%c0_64, %c0_65] : memref<8x128xf32, #tpu.memory_space<vmem>>, vector<8x128xf32>
      tpu.vector_store %arg15[%c0_64, %c0_65], %118 {strides = array<i32>} : memref<8x128xf32, #tpu.memory_space<vmem>>, vector<8x128xf32>,
    } else {
    }
    %c0 = arith.constant 0 : index
    %c0_1 = arith.constant 0 : index
    %c0_2 = arith.constant 0 : index
    %3 = vector.load %arg1[%c0, %c0_1, %c0_2] : memref<1x8x32xf32, #tpu.memory_space<vmem>>, vector<1x8x32xf32>
    %4 = vector.shape_cast %3 : vector<1x8x32xf32> to vector<8x32xf32>
    %c0_3 = arith.constant 0 : index
    %c0_4 = arith.constant 0 : index
    %5 = vector.load %arg15[%c0_3, %c0_4] : memref<8x128xf32, #tpu.memory_space<vmem>>, vector<8x128xf32>
    %c0_5 = arith.constant 0 : index
    %c0_6 = arith.constant 0 : index
    %c0_7 = arith.constant 0 : index
    %6 = vector.load %arg14[%c0_5, %c0_6, %c0_7] : memref<2x8x128xf32, #tpu.memory_space<vmem>>, vector<1x8x128xf32>
    %7 = vector.shape_cast %6 : vector<1x8x128xf32> to vector<8x128xf32>
    %8 = arith.addf %7, %5 : vector<8x128xf32>
    %c0_8 = arith.constant 0 : index
    %c0_9 = arith.constant 0 : index
    %9 = vector.load %arg5[%c0_8, %c0_9] : memref<32x384xf32, #tpu.memory_space<vmem>>, vector<32x384xf32>
    %cst = arith.constant dense<0.000000e+00> : vector<8x384xf32>
    %10 = tpu.matmul %4, %9, %cst {dimension_numbers = #tpu.dot_dimension_numbers<[1], [0], [0], [1], [0, 0, 1, 1], [], []>} : vector<8x32xf32>, vector<32x384xf32>, vector<8x384xf32> -> vector<8x384xf32>
    %c0_10 = arith.constant 0 : index
    %c0_11 = arith.constant 0 : index
    %11 = vector.load %arg7[%c0_10, %c0_11] : memref<2x384xf32, #tpu.memory_space<vmem>>, vector<1x384xf32>
    %12 = vector.broadcast %11 : vector<1x384xf32> to vector<8x384xf32>
    %13 = arith.addf %10, %12 : vector<8x384xf32>
    %c0_12 = arith.constant 0 : index
    %c0_13 = arith.constant 0 : index
    %14 = vector.load %arg6[%c0_12, %c0_13] : memref<128x384xf32, #tpu.memory_space<vmem>>, vector<128x384xf32>
    %cst_14 = arith.constant dense<0.000000e+00> : vector<8x384xf32>
    %15 = tpu.matmul %8, %14, %cst_14 {dimension_numbers = #tpu.dot_dimension_numbers<[1], [0], [0], [1], [0, 0, 1, 1], [], []>} : vector<8x128xf32>, vector<128x384xf32>, vector<8x384xf32> -> vector<8x384xf32>
    %c1 = arith.constant 1 : index
    %c0_15 = arith.constant 0 : index
    %16 = vector.load %arg7[%c1, %c0_15] : memref<2x384xf32, #tpu.memory_space<vmem>>, vector<1x384xf32>
    %17 = vector.broadcast %16 : vector<1x384xf32> to vector<8x384xf32>
    %18 = arith.addf %15, %17 : vector<8x384xf32>
    %19 = vector.extract_strided_slice %13 {offsets = [0, 0], sizes = [8, 128], strides = [1, 1]} : vector<8x384xf32> to vector<8x128xf32>
    %20 = vector.extract_strided_slice %18 {offsets = [0, 0], sizes = [8, 128], strides = [1, 1]} : vector<8x384xf32> to vector<8x128xf32>
    %21 = arith.addf %19, %20 : vector<8x128xf32>
    %22 = arith.negf %21 : vector<8x128xf32>
    %23 = math.exp %22 : vector<8x128xf32>
    %cst_16 = arith.constant 1.000000e+00 : f32
    %24 = vector.broadcast %cst_16 : f32 to vector<8x128xf32>
    %25 = arith.addf %24, %23 : vector<8x128xf32>
    %26 = arith.divf %24, %25 : vector<8x128xf32>
    %27 = vector.extract_strided_slice %13 {offsets = [0, 128], sizes = [8, 128], strides = [1, 1]} : vector<8x384xf32> to vector<8x128xf32>
    %28 = vector.extract_strided_slice %18 {offsets = [0, 128], sizes = [8, 128], strides = [1, 1]} : vector<8x384xf32> to vector<8x128xf32>
    %29 = arith.addf %27, %28 : vector<8x128xf32>
    %30 = arith.negf %29 : vector<8x128xf32>
    %31 = math.exp %30 : vector<8x128xf32>
    %cst_17 = arith.constant 1.000000e+00 : f32
    %32 = vector.broadcast %cst_17 : f32 to vector<8x128xf32>
    %33 = arith.addf %32, %31 : vector<8x128xf32>
    %34 = arith.divf %32, %33 : vector<8x128xf32>
    %35 = vector.extract_strided_slice %13 {offsets = [0, 256], sizes = [8, 128], strides = [1, 1]} : vector<8x384xf32> to vector<8x128xf32>
    %36 = vector.extract_strided_slice %18 {offsets = [0, 256], sizes = [8, 128], strides = [1, 1]} : vector<8x384xf32> to vector<8x128xf32>
    %37 = arith.mulf %26, %36 : vector<8x128xf32>
    %38 = arith.addf %35, %37 : vector<8x128xf32>
    %39 = math.tanh %38 : vector<8x128xf32>
    %cst_18 = arith.constant 1.000000e+00 : f32
    %40 = vector.broadcast %cst_18 : f32 to vector<8x128xf32>
    %41 = arith.subf %40, %34 : vector<8x128xf32>
    %42 = arith.mulf %41, %39 : vector<8x128xf32>
    %43 = arith.mulf %34, %8 : vector<8x128xf32>
    %44 = arith.addf %42, %43 : vector<8x128xf32>
    %c0_19 = arith.constant 0 : index
    %c0_20 = arith.constant 0 : index
    %c0_21 = arith.constant 0 : index
    %45 = vector.load %arg14[%c0_19, %c0_20, %c0_21] : memref<2x8x128xf32, #tpu.memory_space<vmem>>, vector<1x8x128xf32>
    %46 = vector.shape_cast %45 : vector<1x8x128xf32> to vector<8x128xf32>
    %47 = vector.shape_cast %44 : vector<8x128xf32> to vector<1x8x128xf32>
    tpu.vector_store %arg14[%c0_19, %c0_20, %c0_21], %47 {strides = array<i32>} : memref<2x8x128xf32, #tpu.memory_space<vmem>>, vector<1x8x128xf32>,
    %c1_22 = arith.constant 1 : index
    %c0_23 = arith.constant 0 : index
    %c0_24 = arith.constant 0 : index
    %48 = vector.load %arg14[%c1_22, %c0_23, %c0_24] : memref<2x8x128xf32, #tpu.memory_space<vmem>>, vector<1x8x128xf32>
    %49 = vector.shape_cast %48 : vector<1x8x128xf32> to vector<8x128xf32>
    %50 = arith.addf %49, %5 : vector<8x128xf32>
    %c0_25 = arith.constant 0 : index
    %c0_26 = arith.constant 0 : index
    %51 = vector.load %arg8[%c0_25, %c0_26] : memref<128x384xf32, #tpu.memory_space<vmem>>, vector<128x384xf32>
    %cst_27 = arith.constant dense<0.000000e+00> : vector<8x384xf32>
    %52 = tpu.matmul %44, %51, %cst_27 {dimension_numbers = #tpu.dot_dimension_numbers<[1], [0], [0], [1], [0, 0, 1, 1], [], []>} : vector<8x128xf32>, vector<128x384xf32>, vector<8x384xf32> -> vector<8x384xf32>
    %c0_28 = arith.constant 0 : index
    %c0_29 = arith.constant 0 : index
    %53 = vector.load %arg10[%c0_28, %c0_29] : memref<2x384xf32, #tpu.memory_space<vmem>>, vector<1x384xf32>
    %54 = vector.broadcast %53 : vector<1x384xf32> to vector<8x384xf32>
    %55 = arith.addf %52, %54 : vector<8x384xf32>
    %c0_30 = arith.constant 0 : index
    %c0_31 = arith.constant 0 : index
    %56 = vector.load %arg9[%c0_30, %c0_31] : memref<128x384xf32, #tpu.memory_space<vmem>>, vector<128x384xf32>
    %cst_32 = arith.constant dense<0.000000e+00> : vector<8x384xf32>
    %57 = tpu.matmul %50, %56, %cst_32 {dimension_numbers = #tpu.dot_dimension_numbers<[1], [0], [0], [1], [0, 0, 1, 1], [], []>} : vector<8x128xf32>, vector<128x384xf32>, vector<8x384xf32> -> vector<8x384xf32>
    %c1_33 = arith.constant 1 : index
    %c0_34 = arith.constant 0 : index
    %58 = vector.load %arg10[%c1_33, %c0_34] : memref<2x384xf32, #tpu.memory_space<vmem>>, vector<1x384xf32>
    %59 = vector.broadcast %58 : vector<1x384xf32> to vector<8x384xf32>
    %60 = arith.addf %57, %59 : vector<8x384xf32>
    %61 = vector.extract_strided_slice %55 {offsets = [0, 0], sizes = [8, 128], strides = [1, 1]} : vector<8x384xf32> to vector<8x128xf32>
    %62 = vector.extract_strided_slice %60 {offsets = [0, 0], sizes = [8, 128], strides = [1, 1]} : vector<8x384xf32> to vector<8x128xf32>
    %63 = arith.addf %61, %62 : vector<8x128xf32>
    %64 = arith.negf %63 : vector<8x128xf32>
    %65 = math.exp %64 : vector<8x128xf32>
    %cst_35 = arith.constant 1.000000e+00 : f32
    %66 = vector.broadcast %cst_35 : f32 to vector<8x128xf32>
    %67 = arith.addf %66, %65 : vector<8x128xf32>
    %68 = arith.divf %66, %67 : vector<8x128xf32>
    %69 = vector.extract_strided_slice %55 {offsets = [0, 128], sizes = [8, 128], strides = [1, 1]} : vector<8x384xf32> to vector<8x128xf32>
    %70 = vector.extract_strided_slice %60 {offsets = [0, 128], sizes = [8, 128], strides = [1, 1]} : vector<8x384xf32> to vector<8x128xf32>
    %71 = arith.addf %69, %70 : vector<8x128xf32>
    %72 = arith.negf %71 : vector<8x128xf32>
    %73 = math.exp %72 : vector<8x128xf32>
    %cst_36 = arith.constant 1.000000e+00 : f32
    %74 = vector.broadcast %cst_36 : f32 to vector<8x128xf32>
    %75 = arith.addf %74, %73 : vector<8x128xf32>
    %76 = arith.divf %74, %75 : vector<8x128xf32>
    %77 = vector.extract_strided_slice %55 {offsets = [0, 256], sizes = [8, 128], strides = [1, 1]} : vector<8x384xf32> to vector<8x128xf32>
    %78 = vector.extract_strided_slice %60 {offsets = [0, 256], sizes = [8, 128], strides = [1, 1]} : vector<8x384xf32> to vector<8x128xf32>
    %79 = arith.mulf %68, %78 : vector<8x128xf32>
    %80 = arith.addf %77, %79 : vector<8x128xf32>
    %81 = math.tanh %80 : vector<8x128xf32>
    %cst_37 = arith.constant 1.000000e+00 : f32
    %82 = vector.broadcast %cst_37 : f32 to vector<8x128xf32>
    %83 = arith.subf %82, %76 : vector<8x128xf32>
    %84 = arith.mulf %83, %81 : vector<8x128xf32>
    %85 = arith.mulf %76, %50 : vector<8x128xf32>
    %86 = arith.addf %84, %85 : vector<8x128xf32>
    %c1_38 = arith.constant 1 : index
    %c0_39 = arith.constant 0 : index
    %c0_40 = arith.constant 0 : index
    %87 = vector.load %arg14[%c1_38, %c0_39, %c0_40] : memref<2x8x128xf32, #tpu.memory_space<vmem>>, vector<1x8x128xf32>
    %88 = vector.shape_cast %87 : vector<1x8x128xf32> to vector<8x128xf32>
    %89 = vector.shape_cast %86 : vector<8x128xf32> to vector<1x8x128xf32>
    tpu.vector_store %arg14[%c1_38, %c0_39, %c0_40], %89 {strides = array<i32>} : memref<2x8x128xf32, #tpu.memory_space<vmem>>, vector<1x8x128xf32>,
    %c0_41 = arith.constant 0 : index
    %c0_42 = arith.constant 0 : index
    %90 = vector.load %arg11[%c0_41, %c0_42] : memref<128x256xf32, #tpu.memory_space<vmem>>, vector<128x256xf32>
    %cst_43 = arith.constant dense<0.000000e+00> : vector<8x256xf32>
    %91 = tpu.matmul %86, %90, %cst_43 {dimension_numbers = #tpu.dot_dimension_numbers<[1], [0], [0], [1], [0, 0, 1, 1], [], []>} : vector<8x128xf32>, vector<128x256xf32>, vector<8x256xf32> -> vector<8x256xf32>
    %c0_44 = arith.constant 0 : index
    %c0_45 = arith.constant 0 : index
    %92 = vector.load %arg12[%c0_44, %c0_45] : memref<1x256xf32, #tpu.memory_space<vmem>>, vector<1x256xf32>
    %93 = vector.broadcast %92 : vector<1x256xf32> to vector<8x256xf32>
    %94 = arith.addf %91, %93 : vector<8x256xf32>
    %c0_46 = arith.constant 0 : index
    %c0_47 = arith.constant 0 : index
    %c0_48 = arith.constant 0 : index
    %95 = vector.load %arg13[%c0_46, %c0_47, %c0_48] : memref<1x8x256xf32, #tpu.memory_space<vmem>>, vector<1x8x256xf32>
    %96 = vector.shape_cast %95 : vector<1x8x256xf32> to vector<8x256xf32>
    %97 = vector.shape_cast %94 : vector<8x256xf32> to vector<1x8x256xf32>
    tpu.vector_store %arg13[%c0_46, %c0_47, %c0_48], %97 {strides = array<i32>} : memref<1x8x256xf32, #tpu.memory_space<vmem>>, vector<1x8x256xf32>,
    return
  }
  func.func @transform_0(%arg0: i32) -> (i32, i32, i32) {
    %c0_i32 = arith.constant 0 : i32
    %c0_i32_0 = arith.constant 0 : i32
    %c0_i32_1 = arith.constant 0 : i32
    return %arg0, %c0_i32, %c0_i32_0 : i32, i32, i32
  }
  func.func @transform_1(%arg0: i32) -> (i32, i32, i32) {
    %c0_i32 = arith.constant 0 : i32
    %c0_i32_0 = arith.constant 0 : i32
    %c0_i32_1 = arith.constant 0 : i32
    %c0_i32_2 = arith.constant 0 : i32
    return %c0_i32, %c0_i32_0, %c0_i32_1 : i32, i32, i32
  }
  func.func @transform_2(%arg0: i32) -> (i32, i32, i32) {
    %c0_i32 = arith.constant 0 : i32
    %c0_i32_0 = arith.constant 0 : i32
    %c0_i32_1 = arith.constant 0 : i32
    %c0_i32_2 = arith.constant 0 : i32
    return %c0_i32, %c0_i32_0, %c0_i32_1 : i32, i32, i32
  }
  func.func @transform_3(%arg0: i32) -> (i32, i32) {
    %c0_i32 = arith.constant 0 : i32
    %c0_i32_0 = arith.constant 0 : i32
    %c0_i32_1 = arith.constant 0 : i32
    return %c0_i32, %c0_i32_0 : i32, i32
  }
  func.func @transform_4(%arg0: i32) -> (i32, i32) {
    %c0_i32 = arith.constant 0 : i32
    %c0_i32_0 = arith.constant 0 : i32
    %c0_i32_1 = arith.constant 0 : i32
    return %c0_i32, %c0_i32_0 : i32, i32
  }
  func.func @transform_5(%arg0: i32) -> (i32, i32) {
    %c0_i32 = arith.constant 0 : i32
    %c0_i32_0 = arith.constant 0 : i32
    %c0_i32_1 = arith.constant 0 : i32
    return %c0_i32, %c0_i32_0 : i32, i32
  }
  func.func @transform_6(%arg0: i32) -> (i32, i32) {
    %c0_i32 = arith.constant 0 : i32
    %c0_i32_0 = arith.constant 0 : i32
    %c0_i32_1 = arith.constant 0 : i32
    return %c0_i32, %c0_i32_0 : i32, i32
  }
  func.func @transform_7(%arg0: i32) -> (i32, i32) {
    %c0_i32 = arith.constant 0 : i32
    %c0_i32_0 = arith.constant 0 : i32
    %c0_i32_1 = arith.constant 0 : i32
    return %c0_i32, %c0_i32_0 : i32, i32
  }
  func.func @transform_8(%arg0: i32) -> (i32, i32) {
    %c0_i32 = arith.constant 0 : i32
    %c0_i32_0 = arith.constant 0 : i32
    %c0_i32_1 = arith.constant 0 : i32
    return %c0_i32, %c0_i32_0 : i32, i32
  }
  func.func @transform_9(%arg0: i32) -> (i32, i32) {
    %c0_i32 = arith.constant 0 : i32
    %c0_i32_0 = arith.constant 0 : i32
    %c0_i32_1 = arith.constant 0 : i32
    return %c0_i32, %c0_i32_0 : i32, i32
  }
  func.func @transform_10(%arg0: i32) -> (i32, i32) {
    %c0_i32 = arith.constant 0 : i32
    %c0_i32_0 = arith.constant 0 : i32
    %c0_i32_1 = arith.constant 0 : i32
    return %c0_i32, %c0_i32_0 : i32, i32
  }
  func.func @transform_11(%arg0: i32) -> (i32, i32) {
    %c0_i32 = arith.constant 0 : i32
    %c0_i32_0 = arith.constant 0 : i32
    %c0_i32_1 = arith.constant 0 : i32
    return %c0_i32, %c0_i32_0 : i32, i32
  }
  func.func @transform_12(%arg0: i32) -> (i32, i32, i32) {
    %c0_i32 = arith.constant 0 : i32
    %c0_i32_0 = arith.constant 0 : i32
    %c0_i32_1 = arith.constant 0 : i32
    return %arg0, %c0_i32, %c0_i32_0 : i32, i32, i32
  }
  func.func @transform_13(%arg0: i32) -> (i32, i32, i32) {
    %c0_i32 = arith.constant 0 : i32
    %c0_i32_0 = arith.constant 0 : i32
    %c0_i32_1 = arith.constant 0 : i32
    %c0_i32_2 = arith.constant 0 : i32
    return %c0_i32, %c0_i32_0, %c0_i32_1 : i32, i32, i32
  }
}

</mosaic_0001>

<llo_original>
// kernel: decoder_decode.1
$region0: #{decoder_decode.1}
  #allocation0 [shape = 'u32[]', space=smem, size = 0x4, offset = 0x4, fixed_abs, tag = 'smem constant byte address 0x4 - core index']
  #allocation1 [shape = 'u32[144,128]{1,0:T(1,128)}', space=vmem, size = 0x12000, scoped, tag = 'internal scratch']
  #allocation2 [shape = 'f32[8,128]{1,0:T(8,128)}', space=vmem, size = 0x1000, scoped, tag = 'scratch operand']
  %s0 = inlined_call_operand.vmem [shape: f32[5,8,32], index: 0, kind: input, shape index: {}]
  %s1 = inlined_call_operand.hbm [shape: f32[2,8,128], index: 1, kind: input, shape index: {}]
  %s2 = inlined_call_operand.hbm [shape: f32[8,8,128], index: 2, kind: input, shape index: {}]
  %s3 = inlined_call_operand.vmem [shape: f32[1,128], index: 3, kind: input, shape index: {}]
  %s4 = inlined_call_operand.hbm [shape: f32[32,384], index: 4, kind: input, shape index: {}]
  %s5 = inlined_call_operand.vmem [shape: f32[128,384], index: 5, kind: input, shape index: {}]
  %s6 = inlined_call_operand.hbm [shape: f32[2,384], index: 6, kind: input, shape index: {}]
  %s7 = inlined_call_operand.vmem [shape: f32[128,384], index: 7, kind: input, shape index: {}]
  %s8 = inlined_call_operand.hbm [shape: f32[128,384], index: 8, kind: input, shape index: {}]
  %s9 = inlined_call_operand.hbm [shape: f32[2,384], index: 9, kind: input, shape index: {}]
  %s10 = inlined_call_operand.hbm [shape: f32[128,256], index: 10, kind: input, shape index: {}]
  %s11 = inlined_call_operand.vmem [shape: f32[1,256], index: 11, kind: input, shape index: {}]
  %s12 = inlined_call_operand.hbm [shape: f32[5,8,256], index: 12, kind: output, shape index: {0}]
  %s13 = inlined_call_operand.hbm [shape: f32[2,8,128], index: 13, kind: output, shape index: {1}]
  %14 = xla_tuple %s12, %s13
  %s15 = sld [smem:[#allocation0]]
  $region121: #{decoder_decode.1} parent=0
    _
  %s17 = ssub.s32 1, %s15
  %s18 = scalar_select 0, %s17, %s15
  $region1: #{decoder_decode.1} parent=0
    #allocation3 [shape = 'u8[8192]{0}', space=vmem, size = 0x2000, scoped, tag = 'input window, operand 1, single buffered']
    #allocation4 [shape = 's32[2]{0}', space=sflag, size = 0x8, scoped, tag = 'scoped memory for decoder_decode.1']
    #allocation5 [shape = 's32[2]{0}', space=sflag, size = 0x8, scoped, tag = 'scoped memory for decoder_decode.1']
    #allocation6 [shape = 'u8[32768]{0}', space=vmem, size = 0x8000, scoped, tag = 'input window, operand 2, single buffered']
    #allocation7 [shape = 's32[1]{0}', space=sflag, size = 0x4, scoped, tag = 'scoped memory for decoder_decode.1']
    #allocation8 [shape = 'u8[49152]{0}', space=vmem, size = 0xc000, scoped, tag = 'input window, operand 4, single buffered']
    #allocation9 [shape = 'u8[3072]{0}', space=vmem, size = 0xc00, scoped, tag = 'input window, operand 6, single buffered']
    #allocation10 [shape = 's32[1]{0}', space=sflag, size = 0x4, scoped, tag = 'scoped memory for decoder_decode.1']
    #allocation11 [shape = 'u8[196608]{0}', space=vmem, size = 0x30000, scoped, tag = 'input window, operand 8, single buffered']
    #allocation12 [shape = 'u8[3072]{0}', space=vmem, size = 0xc00, scoped, tag = 'input window, operand 9, single buffered']
    #allocation13 [shape = 's32[1]{0}', space=sflag, size = 0x4, scoped, tag = 'scoped memory for decoder_decode.1']
    #allocation14 [shape = 'u8[131072]{0}', space=vmem, size = 0x20000, scoped, tag = 'input window, operand 10, single buffered']
    #allocation15 [shape = 'u8[16384]{0}', space=vmem, size = 0x4000, scoped, tag = 'output window, operand 0']
    #allocation16 [shape = 'u8[8192]{0}', space=vmem, size = 0x2000, scoped, tag = 'output window, operand 1, single buffered']
    #allocation17 [shape = 's32[1]{0}', space=sflag, size = 0x4, scoped, tag = 'scoped memory for decoder_decode.1']
    %19 = vsyncpa [#allocation4], 0
    %20 = vsyncpa [#allocation7], 0
    %21 = vsyncpa [#allocation10], 0
    %22 = vsyncpa [#allocation13], 0
    %23 = vsyncpa [#allocation5], 0
    %s24 = scalar_lea.sflag [#allocation5], 1
    %25 = vsyncpa %s24, 0
    %26 = vsyncpa [#allocation17], 0
    loop: start=0, step=1, limit=7
    $region2: #{decoder_decode.1} parent=1 // loop_pre_header
      _
    $region3: #{decoder_decode.1} parent=1 // loop_header
      %s28 = sphi 0, %s32
      %p29 = scmp.ge.s32.totalorder %s28, 7
      %s38 = sphi 0, %s40
      %s41 = sphi 0, %s38
      %s42 = sphi 0, %s41
      %s58 = sphi 0, %s42
      %s62 = sphi 0, %s62
      %s64 = sphi 0, %s62
      %s65 = sphi 0, %s64
      %s79 = sphi 0, %s65
      %s83 = sphi 0, %s83
      %s85 = sphi 0, %s83
      %s86 = sphi 0, %s85
      %s100 = sphi 0, %s86
      %s104 = sphi 0, %s104
      %s106 = sphi 0, %s104
      %s107 = sphi 0, %s106
      %s121 = sphi 0, %s107
      %s125 = sphi 0, %s125
      %s127 = sphi 0, %s125
      %s128 = sphi 0, %s127
      %s142 = sphi 0, %s128
      %s146 = sphi 0, %s146
      %s148 = sphi 0, %s146
      %s149 = sphi 0, %s148
      %s163 = sphi 0, %s149
      %s167 = sphi 0, %s167
      %s169 = sphi 0, %s167
      %s170 = sphi 0, %s169
      %s184 = sphi 0, %s170
      %s188 = sphi 0, %s188
      %s190 = sphi 0, %s188
      %s191 = sphi 0, %s190
      %s205 = sphi 0, %s191
      %s209 = sphi 0, %s209
      %s211 = sphi 0, %s209
      %s212 = sphi 0, %s211
      %s226 = sphi 0, %s212
      %s230 = sphi 0, %s230
      %s232 = sphi 0, %s230
      %s233 = sphi 0, %s232
      %s247 = sphi 0, %s233
      %s251 = sphi 0, %s251
      %s253 = sphi 0, %s251
      %s254 = sphi 0, %s253
      %s268 = sphi 0, %s254
      %s272 = sphi 0, %s272
      %s274 = sphi 0, %s272
      %s275 = sphi 0, %s274
      %s289 = sphi 0, %s275
      %s295 = sphi 0, %s297
      %s298 = sphi 0, %s295
      %s299 = sphi 0, %s298
      %s315 = sphi 0, %s299
      %s319 = sphi 0, %s319
      %s321 = sphi 0, %s319
      %s322 = sphi 0, %s321
      %s336 = sphi 0, %s322
    $region4: #{decoder_decode.1} parent=1 // loop_header_branch
      %31 = sbr.rel (%p29) target = $region8
    $region5: #{decoder_decode.1} parent=1 // loop_body
      %s33 = ssub.s32 %s28, 1
      %s34 = ssub.s32 %s28, 2
      %s35 = sadd.s32 %s28, 1
      %s36 = ssub.s32 %s28, %s35
      %p37 = scmp.eq.s32.totalorder %s36, 0
      %s39 = sadd.s32 %s38, 1
      %s40 = scalar_select %p37, %s38, %s39
      %p43 = pneg %p37
      %p44 = scmp.eq.s32.totalorder %s28, 4
      %p45 = por %p43, %p44
      %p46 = scmp.ne.s32.totalorder %s38, %s41
      %p47 = scmp.eq.s32.totalorder %s28, 0
      %p48 = por %p46, %p47
      %p49 = scmp.ne.s32.totalorder %s38, %s41
      %p50 = scmp.eq.s32.totalorder %s33, 4
      %p51 = por %p49, %p50
      %p52 = scmp.ne.s32.totalorder %s41, %s42
      %p53 = scmp.eq.s32.totalorder %s33, 0
      %p54 = por %p52, %p53
      %p55 = scmp.ne.s32.totalorder %s41, %s42
      %p56 = scmp.eq.s32.totalorder %s34, 4
      %p57 = por %p55, %p56
      %p59 = scmp.ne.s32.totalorder %s42, %s58
      %p60 = scmp.eq.s32.totalorder %s34, 0
      %p61 = por %p59, %p60
      %s63 = sadd.s32 %s62, 1
      %p66 = scmp.eq.s32.totalorder %s28, 4
      %p67 = scmp.ne.s32.totalorder %s62, %s64
      %p68 = scmp.eq.s32.totalorder %s28, 0
      %p69 = por %p67, %p68
      %p70 = scmp.ne.s32.totalorder %s62, %s64
      %p71 = scmp.eq.s32.totalorder %s33, 4
      %p72 = por %p70, %p71
      %p73 = scmp.ne.s32.totalorder %s64, %s65
      %p74 = scmp.eq.s32.totalorder %s33, 0
      %p75 = por %p73, %p74
      %p76 = scmp.ne.s32.totalorder %s64, %s65
      %p77 = scmp.eq.s32.totalorder %s34, 4
      %p78 = por %p76, %p77
      %p80 = scmp.ne.s32.totalorder %s65, %s79
      %p81 = scmp.eq.s32.totalorder %s34, 0
      %p82 = por %p80, %p81
      %s84 = sadd.s32 %s83, 1
      %p87 = scmp.eq.s32.totalorder %s28, 4
      %p88 = scmp.ne.s32.totalorder %s83, %s85
      %p89 = scmp.eq.s32.totalorder %s28, 0
      %p90 = por %p88, %p89
      %p91 = scmp.ne.s32.totalorder %s83, %s85
      %p92 = scmp.eq.s32.totalorder %s33, 4
      %p93 = por %p91, %p92
      %p94 = scmp.ne.s32.totalorder %s85, %s86
      %p95 = scmp.eq.s32.totalorder %s33, 0
      %p96 = por %p94, %p95
      %p97 = scmp.ne.s32.totalorder %s85, %s86
      %p98 = scmp.eq.s32.totalorder %s34, 4
      %p99 = por %p97, %p98
      %p101 = scmp.ne.s32.totalorder %s86, %s100
      %p102 = scmp.eq.s32.totalorder %s34, 0
      %p103 = por %p101, %p102
      %s105 = sadd.s32 %s104, 1
      %p108 = scmp.eq.s32.totalorder %s28, 4
      %p109 = scmp.ne.s32.totalorder %s104, %s106
      %p110 = scmp.eq.s32.totalorder %s28, 0
      %p111 = por %p109, %p110
      %p112 = scmp.ne.s32.totalorder %s104, %s106
      %p113 = scmp.eq.s32.totalorder %s33, 4
      %p114 = por %p112, %p113
      %p115 = scmp.ne.s32.totalorder %s106, %s107
      %p116 = scmp.eq.s32.totalorder %s33, 0
      %p117 = por %p115, %p116
      %p118 = scmp.ne.s32.totalorder %s106, %s107
      %p119 = scmp.eq.s32.totalorder %s34, 4
      %p120 = por %p118, %p119
      %p122 = scmp.ne.s32.totalorder %s107, %s121
      %p123 = scmp.eq.s32.totalorder %s34, 0
      %p124 = por %p122, %p123
      %s126 = sadd.s32 %s125, 1
      %p129 = scmp.eq.s32.totalorder %s28, 4
      %p130 = scmp.ne.s32.totalorder %s125, %s127
      %p131 = scmp.eq.s32.totalorder %s28, 0
      %p132 = por %p130, %p131
      %p133 = scmp.ne.s32.totalorder %s125, %s127
      %p134 = scmp.eq.s32.totalorder %s33, 4
      %p135 = por %p133, %p134
      %p136 = scmp.ne.s32.totalorder %s127, %s128
      %p137 = scmp.eq.s32.totalorder %s33, 0
      %p138 = por %p136, %p137
      %p139 = scmp.ne.s32.totalorder %s127, %s128
      %p140 = scmp.eq.s32.totalorder %s34, 4
      %p141 = por %p139, %p140
      %p143 = scmp.ne.s32.totalorder %s128, %s142
      %p144 = scmp.eq.s32.totalorder %s34, 0
      %p145 = por %p143, %p144
      %s147 = sadd.s32 %s146, 1
      %p150 = scmp.eq.s32.totalorder %s28, 4
      %p151 = scmp.ne.s32.totalorder %s146, %s148
      %p152 = scmp.eq.s32.totalorder %s28, 0
      %p153 = por %p151, %p152
      %p154 = scmp.ne.s32.totalorder %s146, %s148
      %p155 = scmp.eq.s32.totalorder %s33, 4
      %p156 = por %p154, %p155
      %p157 = scmp.ne.s32.totalorder %s148, %s149
      %p158 = scmp.eq.s32.totalorder %s33, 0
      %p159 = por %p157, %p158
      %p160 = scmp.ne.s32.totalorder %s148, %s149
      %p161 = scmp.eq.s32.totalorder %s34, 4
      %p162 = por %p160, %p161
      %p164 = scmp.ne.s32.totalorder %s149, %s163
      %p165 = scmp.eq.s32.totalorder %s34, 0
      %p166 = por %p164, %p165
      %s168 = sadd.s32 %s167, 1
      %p171 = scmp.eq.s32.totalorder %s28, 4
      %p172 = scmp.ne.s32.totalorder %s167, %s169
      %p173 = scmp.eq.s32.totalorder %s28, 0
      %p174 = por %p172, %p173
      %p175 = scmp.ne.s32.totalorder %s167, %s169
      %p176 = scmp.eq.s32.totalorder %s33, 4
      %p177 = por %p175, %p176
      %p178 = scmp.ne.s32.totalorder %s169, %s170
      %p179 = scmp.eq.s32.totalorder %s33, 0
      %p180 = por %p178, %p179
      %p181 = scmp.ne.s32.totalorder %s169, %s170
      %p182 = scmp.eq.s32.totalorder %s34, 4
      %p183 = por %p181, %p182
      %p185 = scmp.ne.s32.totalorder %s170, %s184
      %p186 = scmp.eq.s32.totalorder %s34, 0
      %p187 = por %p185, %p186
      %s189 = sadd.s32 %s188, 1
      %p192 = scmp.eq.s32.totalorder %s28, 4
      %p193 = scmp.ne.s32.totalorder %s188, %s190
      %p194 = scmp.eq.s32.totalorder %s28, 0
      %p195 = por %p193, %p194
      %p196 = scmp.ne.s32.totalorder %s188, %s190
      %p197 = scmp.eq.s32.totalorder %s33, 4
      %p198 = por %p196, %p197
      %p199 = scmp.ne.s32.totalorder %s190, %s191
      %p200 = scmp.eq.s32.totalorder %s33, 0
      %p201 = por %p199, %p200
      %p202 = scmp.ne.s32.totalorder %s190, %s191
      %p203 = scmp.eq.s32.totalorder %s34, 4
      %p204 = por %p202, %p203
      %p206 = scmp.ne.s32.totalorder %s191, %s205
      %p207 = scmp.eq.s32.totalorder %s34, 0
      %p208 = por %p206, %p207
      %s210 = sadd.s32 %s209, 1
      %p213 = scmp.eq.s32.totalorder %s28, 4
      %p214 = scmp.ne.s32.totalorder %s209, %s211
      %p215 = scmp.eq.s32.totalorder %s28, 0
      %p216 = por %p214, %p215
      %p217 = scmp.ne.s32.totalorder %s209, %s211
      %p218 = scmp.eq.s32.totalorder %s33, 4
      %p219 = por %p217, %p218
      %p220 = scmp.ne.s32.totalorder %s211, %s212
      %p221 = scmp.eq.s32.totalorder %s33, 0
      %p222 = por %p220, %p221
      %p223 = scmp.ne.s32.totalorder %s211, %s212
      %p224 = scmp.eq.s32.totalorder %s34, 4
      %p225 = por %p223, %p224
      %p227 = scmp.ne.s32.totalorder %s212, %s226
      %p228 = scmp.eq.s32.totalorder %s34, 0
      %p229 = por %p227, %p228
      %s231 = sadd.s32 %s230, 1
      %p234 = scmp.eq.s32.totalorder %s28, 4
      %p235 = scmp.ne.s32.totalorder %s230, %s232
      %p236 = scmp.eq.s32.totalorder %s28, 0
      %p237 = por %p235, %p236
      %p238 = scmp.ne.s32.totalorder %s230, %s232
      %p239 = scmp.eq.s32.totalorder %s33, 4
      %p240 = por %p238, %p239
      %p241 = scmp.ne.s32.totalorder %s232, %s233
      %p242 = scmp.eq.s32.totalorder %s33, 0
      %p243 = por %p241, %p242
      %p244 = scmp.ne.s32.totalorder %s232, %s233
      %p245 = scmp.eq.s32.totalorder %s34, 4
      %p246 = por %p244, %p245
      %p248 = scmp.ne.s32.totalorder %s233, %s247
      %p249 = scmp.eq.s32.totalorder %s34, 0
      %p250 = por %p248, %p249
      %s252 = sadd.s32 %s251, 1
      %p255 = scmp.eq.s32.totalorder %s28, 4
      %p256 = scmp.ne.s32.totalorder %s251, %s253
      %p257 = scmp.eq.s32.totalorder %s28, 0
      %p258 = por %p256, %p257
      %p259 = scmp.ne.s32.totalorder %s251, %s253
      %p260 = scmp.eq.s32.totalorder %s33, 4
      %p261 = por %p259, %p260
      %p262 = scmp.ne.s32.totalorder %s253, %s254
      %p263 = scmp.eq.s32.totalorder %s33, 0
      %p264 = por %p262, %p263
      %p265 = scmp.ne.s32.totalorder %s253, %s254
      %p266 = scmp.eq.s32.totalorder %s34, 4
      %p267 = por %p265, %p266
      %p269 = scmp.ne.s32.totalorder %s254, %s268
      %p270 = scmp.eq.s32.totalorder %s34, 0
      %p271 = por %p269, %p270
      %s273 = sadd.s32 %s272, 1
      %p276 = scmp.eq.s32.totalorder %s28, 4
      %p277 = scmp.ne.s32.totalorder %s272, %s274
      %p278 = scmp.eq.s32.totalorder %s28, 0
      %p279 = por %p277, %p278
      %p280 = scmp.ne.s32.totalorder %s272, %s274
      %p281 = scmp.eq.s32.totalorder %s33, 4
      %p282 = por %p280, %p281
      %p283 = scmp.ne.s32.totalorder %s274, %s275
      %p284 = scmp.eq.s32.totalorder %s33, 0
      %p285 = por %p283, %p284
      %p286 = scmp.ne.s32.totalorder %s274, %s275
      %p287 = scmp.eq.s32.totalorder %s34, 4
      %p288 = por %p286, %p287
      %p290 = scmp.ne.s32.totalorder %s275, %s289
      %p291 = scmp.eq.s32.totalorder %s34, 0
      %p292 = por %p290, %p291
      %s293 = ssub.s32 %s28, %s35
      %p294 = scmp.eq.s32.totalorder %s293, 0
      %s296 = sadd.s32 %s295, 1
      %s297 = scalar_select %p294, %s295, %s296
      %p300 = pneg %p294
      %p301 = scmp.eq.s32.totalorder %s28, 4
      %p302 = por %p300, %p301
      %p303 = scmp.ne.s32.totalorder %s295, %s298
      %p304 = scmp.eq.s32.totalorder %s28, 0
      %p305 = por %p303, %p304
      %p306 = scmp.ne.s32.totalorder %s295, %s298
      %p307 = scmp.eq.s32.totalorder %s33, 4
      %p308 = por %p306, %p307
      %p309 = scmp.ne.s32.totalorder %s298, %s299
      %p310 = scmp.eq.s32.totalorder %s33, 0
      %p311 = por %p309, %p310
      %p312 = scmp.ne.s32.totalorder %s298, %s299
      %p313 = scmp.eq.s32.totalorder %s34, 4
      %p314 = por %p312, %p313
      %p316 = scmp.ne.s32.totalorder %s299, %s315
      %p317 = scmp.eq.s32.totalorder %s34, 0
      %p318 = por %p316, %p317
      %s320 = sadd.s32 %s319, 1
      %p323 = scmp.eq.s32.totalorder %s28, 4
      %p324 = scmp.ne.s32.totalorder %s319, %s321
      %p325 = scmp.eq.s32.totalorder %s28, 0
      %p326 = por %p324, %p325
      %p327 = scmp.ne.s32.totalorder %s319, %s321
      %p328 = scmp.eq.s32.totalorder %s33, 4
      %p329 = por %p327, %p328
      %p330 = scmp.ne.s32.totalorder %s321, %s322
      %p331 = scmp.eq.s32.totalorder %s33, 0
      %p332 = por %p330, %p331
      %p333 = scmp.ne.s32.totalorder %s321, %s322
      %p334 = scmp.eq.s32.totalorder %s34, 4
      %p335 = por %p333, %p334
      %p337 = scmp.ne.s32.totalorder %s322, %s336
      %p338 = scmp.eq.s32.totalorder %s34, 0
      %p339 = por %p337, %p338
      %p340 = scmp.le.s32.totalorder 1, %s28
      %p341 = scmp.lt.s32.totalorder %s28, 6
      %p342 = pnand %p340, %p341
      %p343 = pneg %p342
      // Predicated region
      $region9: #{decoder_decode.1} parent=5 // pred_check
        _
      $region10: #{decoder_decode.1} parent=5 // pred_check_branch
        %345 = sbr.rel (%p342) target = $region12
      $region11: #{decoder_decode.1} parent=5 // pred_region
        %s346 = ssub.s32 %s28, 1
        // Predicated region
        $region13: #{decoder_decode.1} parent=11 // pred_check
          %p347 = pneg %p75
        $region14: #{decoder_decode.1} parent=11 // pred_check_branch
          %349 = sbr.rel (%p347) target = $region16
        $region15: #{decoder_decode.1} parent=11 // pred_region
          %s351 = ssub.s32 256, 256
          %352 = vsyncadd [#allocation4], %s351
          %s353 = sshll.u32 [#allocation3], 4
          %s354 = int_to_ptr.vmem [resolvable:$true] %s353
          %359 = dma.hbm_to_vmem [thread:$0]  %s1, 256, %s354, [#allocation4], 128, 128, 8
        $region16: #{decoder_decode.1} parent=11 // pred_fallthru
          _
        // Predicated region
        $region17: #{decoder_decode.1} parent=11 // pred_check
          %p360 = pneg %p96
        $region18: #{decoder_decode.1} parent=11 // pred_check_branch
          %362 = sbr.rel (%p360) target = $region20
        $region19: #{decoder_decode.1} parent=11 // pred_region
          %s364 = ssub.s32 1024, 1024
          %365 = vsyncadd [#allocation7], %s364
          %s366 = sshll.u32 [#allocation6], 4
          %s367 = int_to_ptr.vmem [resolvable:$true] %s366
          %372 = dma.hbm_to_vmem [thread:$0]  %s2, 1024, %s367, [#allocation7], 128, 128, 8
        $region20: #{decoder_decode.1} parent=11 // pred_fallthru
          _
        // Predicated region
        $region21: #{decoder_decode.1} parent=11 // pred_check
          %p373 = pneg %p117
        $region22: #{decoder_decode.1} parent=11 // pred_check_branch
          %375 = sbr.rel (%p373) target = $region24
        $region23: #{decoder_decode.1} parent=11 // pred_region
          _
        $region24: #{decoder_decode.1} parent=11 // pred_fallthru
          _
        // Predicated region
        $region25: #{decoder_decode.1} parent=11 // pred_check
          %p376 = pneg %p138
        $region26: #{decoder_decode.1} parent=11 // pred_check_branch
          %378 = sbr.rel (%p376) target = $region28
        $region27: #{decoder_decode.1} parent=11 // pred_region
          %s380 = ssub.s32 1536, 1536
          %381 = vsyncadd [#allocation7], %s380
          %s382 = sshll.u32 [#allocation8], 4
          %s383 = int_to_ptr.vmem [resolvable:$true] %s382
          %388 = dma.hbm_to_vmem [thread:$0]  %s4, 1536, %s383, [#allocation7], 384, 384, 24
        $region28: #{decoder_decode.1} parent=11 // pred_fallthru
          _
        // Predicated region
        $region29: #{decoder_decode.1} parent=11 // pred_check
          %p389 = pneg %p159
        $region30: #{decoder_decode.1} parent=11 // pred_check_branch
          %391 = sbr.rel (%p389) target = $region32
        $region31: #{decoder_decode.1} parent=11 // pred_region
          _
        $region32: #{decoder_decode.1} parent=11 // pred_fallthru
          _
        // Predicated region
        $region33: #{decoder_decode.1} parent=11 // pred_check
          %p392 = pneg %p180
        $region34: #{decoder_decode.1} parent=11 // pred_check_branch
          %394 = sbr.rel (%p392) target = $region36
        $region35: #{decoder_decode.1} parent=11 // pred_region
          %s396 = ssub.s32 96, 96
          %397 = vsyncadd [#allocation10], %s396
          %s399 = sshll.u32 [#allocation9], 4
          %s400 = int_to_ptr.vmem [resolvable:$true] %s399
          %402 = dma.hbm_to_vmem [thread:$0]  %s6, 96, %s400, [#allocation10]
        $region36: #{decoder_decode.1} parent=11 // pred_fallthru
          _
        // Predicated region
        $region37: #{decoder_decode.1} parent=11 // pred_check
          %p403 = pneg %p201
        $region38: #{decoder_decode.1} parent=11 // pred_check_branch
          %405 = sbr.rel (%p403) target = $region40
        $region39: #{decoder_decode.1} parent=11 // pred_region
          _
        $region40: #{decoder_decode.1} parent=11 // pred_fallthru
          _
        // Predicated region
        $region41: #{decoder_decode.1} parent=11 // pred_check
          %p406 = pneg %p222
        $region42: #{decoder_decode.1} parent=11 // pred_check_branch
          %408 = sbr.rel (%p406) target = $region44
        $region43: #{decoder_decode.1} parent=11 // pred_region
          %s410 = ssub.s32 6144, 6144
          %411 = vsyncadd [#allocation10], %s410
          %s412 = sshll.u32 [#allocation11], 4
          %s413 = int_to_ptr.vmem [resolvable:$true] %s412
          %418 = dma.hbm_to_vmem [thread:$0]  %s8, 6144, %s413, [#allocation10], 384, 384, 24
        $region44: #{decoder_decode.1} parent=11 // pred_fallthru
          _
        // Predicated region
        $region45: #{decoder_decode.1} parent=11 // pred_check
          %p419 = pneg %p243
        $region46: #{decoder_decode.1} parent=11 // pred_check_branch
          %421 = sbr.rel (%p419) target = $region48
        $region47: #{decoder_decode.1} parent=11 // pred_region
          %s423 = ssub.s32 96, 96
          %424 = vsyncadd [#allocation13], %s423
          %s426 = sshll.u32 [#allocation12], 4
          %s427 = int_to_ptr.vmem [resolvable:$true] %s426
          %429 = dma.hbm_to_vmem [thread:$0]  %s9, 96, %s427, [#allocation13]
        $region48: #{decoder_decode.1} parent=11 // pred_fallthru
          _
        // Predicated region
        $region49: #{decoder_decode.1} parent=11 // pred_check
          %p430 = pneg %p264
        $region50: #{decoder_decode.1} parent=11 // pred_check_branch
          %432 = sbr.rel (%p430) target = $region52
        $region51: #{decoder_decode.1} parent=11 // pred_region
          %s434 = ssub.s32 4096, 4096
          %435 = vsyncadd [#allocation13], %s434
          %s436 = sshll.u32 [#allocation14], 4
          %s437 = int_to_ptr.vmem [resolvable:$true] %s436
          %442 = dma.hbm_to_vmem [thread:$0]  %s10, 4096, %s437, [#allocation13], 256, 256, 16
        $region52: #{decoder_decode.1} parent=11 // pred_fallthru
          _
        // Predicated region
        $region53: #{decoder_decode.1} parent=11 // pred_check
          %p443 = pneg %p285
        $region54: #{decoder_decode.1} parent=11 // pred_check_branch
          %445 = sbr.rel (%p443) target = $region56
        $region55: #{decoder_decode.1} parent=11 // pred_region
          _
        $region56: #{decoder_decode.1} parent=11 // pred_fallthru
          _
      $region12: #{decoder_decode.1} parent=5 // pred_fallthru
        _
      %p446 = scmp.lt.s32.totalorder %s28, 5
      // Predicated region
      $region57: #{decoder_decode.1} parent=5 // pred_check
        %p447 = pneg %p446
      $region58: #{decoder_decode.1} parent=5 // pred_check_branch
        %449 = sbr.rel (%p447) target = $region60
      $region59: #{decoder_decode.1} parent=5 // pred_region
        // Predicated region
        $region61: #{decoder_decode.1} parent=59 // pred_check
          %p450 = pneg %p48
        $region62: #{decoder_decode.1} parent=59 // pred_check_branch
          %452 = sbr.rel (%p450) target = $region64
        $region63: #{decoder_decode.1} parent=59 // pred_region
          %p453 = scmp.lt.s32.totalorder %s28, 4
          %s454 = scalar_select %p453, %s28, 4
          %s455 = smul.addr %s454, 8
          %s456 = scalar_lea.vmem %s0, %s455
        $region64: #{decoder_decode.1} parent=59 // pred_fallthru
          _
      $region60: #{decoder_decode.1} parent=5 // pred_fallthru
        _
      %p457 = scmp.le.s32.totalorder 1, %s28
      %p458 = scmp.lt.s32.totalorder %s28, 6
      %p459 = pnand %p457, %p458
      %p460 = pneg %p459
      // Predicated region
      $region65: #{decoder_decode.1} parent=5 // pred_check
        _
      $region66: #{decoder_decode.1} parent=5 // pred_check_branch
        %462 = sbr.rel (%p459) target = $region68
      $region67: #{decoder_decode.1} parent=5 // pred_region
        %s463 = ssub.s32 %s28, 1
        // Predicated region
        $region69: #{decoder_decode.1} parent=67 // pred_check
          %p464 = pneg %p75
        $region70: #{decoder_decode.1} parent=67 // pred_check_branch
          %466 = sbr.rel (%p464) target = $region72
        $region71: #{decoder_decode.1} parent=67 // pred_region
          %467 = dma.done [#allocation4], 256
        $region72: #{decoder_decode.1} parent=67 // pred_fallthru
          _
        // Predicated region
        $region73: #{decoder_decode.1} parent=67 // pred_check
          %p468 = pneg %p96
        $region74: #{decoder_decode.1} parent=67 // pred_check_branch
          %470 = sbr.rel (%p468) target = $region76
        $region75: #{decoder_decode.1} parent=67 // pred_region
          %471 = dma.done [#allocation7], 1024
        $region76: #{decoder_decode.1} parent=67 // pred_fallthru
          _
        // Predicated region
        $region77: #{decoder_decode.1} parent=67 // pred_check
          %p472 = pneg %p138
        $region78: #{decoder_decode.1} parent=67 // pred_check_branch
          %474 = sbr.rel (%p472) target = $region80
        $region79: #{decoder_decode.1} parent=67 // pred_region
          %475 = dma.done [#allocation7], 1536
        $region80: #{decoder_decode.1} parent=67 // pred_fallthru
          _
        // Predicated region
        $region81: #{decoder_decode.1} parent=67 // pred_check
          %p476 = pneg %p180
        $region82: #{decoder_decode.1} parent=67 // pred_check_branch
          %478 = sbr.rel (%p476) target = $region84
        $region83: #{decoder_decode.1} parent=67 // pred_region
          %479 = dma.done [#allocation10], 96
        $region84: #{decoder_decode.1} parent=67 // pred_fallthru
          _
        // Predicated region
        $region85: #{decoder_decode.1} parent=67 // pred_check
          %p480 = pneg %p222
        $region86: #{decoder_decode.1} parent=67 // pred_check_branch
          %482 = sbr.rel (%p480) target = $region88
        $region87: #{decoder_decode.1} parent=67 // pred_region
          %483 = dma.done [#allocation10], 6144
        $region88: #{decoder_decode.1} parent=67 // pred_fallthru
          _
        // Predicated region
        $region89: #{decoder_decode.1} parent=67 // pred_check
          %p484 = pneg %p243
        $region90: #{decoder_decode.1} parent=67 // pred_check_branch
          %486 = sbr.rel (%p484) target = $region92
        $region91: #{decoder_decode.1} parent=67 // pred_region
          %487 = dma.done [#allocation13], 96
        $region92: #{decoder_decode.1} parent=67 // pred_fallthru
          _
        // Predicated region
        $region93: #{decoder_decode.1} parent=67 // pred_check
          %p488 = pneg %p264
        $region94: #{decoder_decode.1} parent=67 // pred_check_branch
          %490 = sbr.rel (%p488) target = $region96
        $region95: #{decoder_decode.1} parent=67 // pred_region
          %491 = dma.done [#allocation13], 4096
        $region96: #{decoder_decode.1} parent=67 // pred_fallthru
          _
        %p492 = scmp.lt.s32.totalorder %s33, 4
        %s493 = scalar_select %p492, %s33, 4
        %s494 = smul.addr %s493, 8
        %s495 = scalar_lea.vmem %s0, %s494
        %p496 = pneg %p54
        %p497 = pneg %p51
        %p498 = pneg %p75
        %p499 = pneg %p72
        %p500 = pneg %p96
        %p501 = pneg %p93
        %p502 = pneg %p117
        %p503 = pneg %p114
        %p504 = pneg %p138
        %p505 = pneg %p135
        %p506 = pneg %p159
        %p507 = pneg %p156
        %p508 = pneg %p180
        %p509 = pneg %p177
        %p510 = pneg %p201
        %p511 = pneg %p198
        %p512 = pneg %p222
        %p513 = pneg %p219
        %p514 = pneg %p243
        %p515 = pneg %p240
        %p516 = pneg %p264
        %p517 = pneg %p261
        %p518 = pneg %p285
        %p519 = pneg %p282
        %p520 = pneg %p311
        %p521 = pneg %p308
        %s522 = sand.u32 %s298, 1
        %s523 = scalar_lea.sflag [#allocation5], %s522
        %s524 = sand.u32 %s298, 1
        %s525 = smul.addr %s524, 16
        %s526 = scalar_lea.vmem [#allocation15], %s525
        %p527 = pneg %p332
        %p528 = pneg %p329
        %p529 = scmp.lt.s32.totalorder %s33, 4
        %s530 = scalar_select %p529, %s33, 4
        %s531 = smul.addr %s530, 8
        %s532 = scalar_lea.vmem %s0, %s531
        %p533 = scmp.eq.s32.totalorder %s33, 0
        // Predicated region
        $region97: #{decoder_decode.1} parent=67 // pred_check
          %p534 = pneg %p533
        $region98: #{decoder_decode.1} parent=67 // pred_check_branch
          %536 = sbr.rel (%p534) target = $region100
        $region99: #{decoder_decode.1} parent=67 // pred_region
          %v537 = vld [vmem:[#allocation3] sm:$0xff]
          %v538 = vld [vmem:[#allocation3 + $0x8] sm:$0xff]
          %539 = vst [vmem:[#allocation16] sm:$0xff] %v537
          %540 = vst [vmem:[#allocation16 + $0x8] sm:$0xff] %v538
          %v541 = vld [vmem:[#allocation6] sm:$0xff]
          %v542 = vld [vmem:[#allocation6 + $0x8] sm:$0xff]
          %v543 = vld [vmem:[#allocation6 + $0x10] sm:$0xff]
          %v544 = vld [vmem:[#allocation6 + $0x18] sm:$0xff]
          %v545 = vld [vmem:[#allocation6 + $0x20] sm:$0xff]
          %v546 = vld [vmem:[#allocation6 + $0x28] sm:$0xff]
          %v547 = vld [vmem:[#allocation6 + $0x30] sm:$0xff]
          %v548 = vld [vmem:[#allocation6 + $0x38] sm:$0xff]
          %v549 = vld [vmem:[%s3] sm:$0x1]
          %v551 = vlaneseq
          %v552 = vshrl.u32 %v551, 7
          %v553 = vsub.s32 0, %v552
          %v554 = vrot.slane %v549, %v553
          %v556 = vmul.f32 %v541, %v554
          %v557 = vmul.f32 %v542, %v554
          %v558 = vmul.f32 %v543, %v554
          %v559 = vmul.f32 %v544, %v554
          %v560 = vmul.f32 %v545, %v554
          %v561 = vmul.f32 %v546, %v554
          %v562 = vmul.f32 %v547, %v554
          %v563 = vmul.f32 %v548, %v554
          %564 = vadd.xlane.f32.xlu0 %v556
          %v565 = vpop.xlane.xlu0 %564
          %566 = vadd.xlane.f32.xlu0 %v557
          %v567 = vpop.xlane.xlu0 %566
          %568 = vadd.xlane.f32.xlu0 %v558
          %v569 = vpop.xlane.xlu0 %568
          %570 = vadd.xlane.f32.xlu0 %v559
          %v571 = vpop.xlane.xlu0 %570
          %572 = vadd.xlane.f32.xlu0 %v560
          %v573 = vpop.xlane.xlu0 %572
          %574 = vadd.xlane.f32.xlu0 %v561
          %v575 = vpop.xlane.xlu0 %574
          %576 = vadd.xlane.f32.xlu0 %v562
          %v577 = vpop.xlane.xlu0 %576
          %578 = vadd.xlane.f32.xlu0 %v563
          %v579 = vpop.xlane.xlu0 %578
          %v588 = vlaneseq
          %v589 = vand.u32 %v588, 127
          %v590 = vlaneseq
          %v591 = vshrl.u32 %v590, 7
          %v592 = vsub.s32 %v589, %v591
          %v593 = vrot.slane %v565, %v592
          %v594 = vlaneseq
          %v595 = vshrl.u32 %v594, 7
          %v596 = vsub.s32 %v589, %v595
          %v597 = vrot.slane %v567, %v596
          %v598 = vlaneseq
          %v599 = vshrl.u32 %v598, 7
          %v600 = vsub.s32 %v589, %v599
          %v601 = vrot.slane %v569, %v600
          %v602 = vlaneseq
          %v603 = vshrl.u32 %v602, 7
          %v604 = vsub.s32 %v589, %v603
          %v605 = vrot.slane %v571, %v604
          %v606 = vlaneseq
          %v607 = vshrl.u32 %v606, 7
          %v608 = vsub.s32 %v589, %v607
          %v609 = vrot.slane %v573, %v608
          %v610 = vlaneseq
          %v611 = vshrl.u32 %v610, 7
          %v612 = vsub.s32 %v589, %v611
          %v613 = vrot.slane %v575, %v612
          %v614 = vlaneseq
          %v615 = vshrl.u32 %v614, 7
          %v616 = vsub.s32 %v589, %v615
          %v617 = vrot.slane %v577, %v616
          %v618 = vlaneseq
          %v619 = vshrl.u32 %v618, 7
          %v620 = vsub.s32 %v589, %v619
          %v621 = vrot.slane %v579, %v620
          %vm622 = vcmask 1041409
          %v623 = vsel %vm622, %v597, %v593
          %vm624 = vcmask 1042434
          %v625 = vsel %vm624, %v601, %v623
          %vm626 = vcmask 1043459
          %v627 = vsel %vm626, %v605, %v625
          %vm628 = vcmask 1044484
          %v629 = vsel %vm628, %v609, %v627
          %vm630 = vcmask 1045509
          %v631 = vsel %vm630, %v613, %v629
          %vm632 = vcmask 1046534
          %v633 = vsel %vm632, %v617, %v631
          %vm634 = vcmask 1047559
          %v635 = vsel %vm634, %v621, %v633
          %vm637 = vcmask 64512
          %v638 = vsel %vm637, %v635, -inf
          %639 = vmax.xlane.f32.xlu0 %v638
          %v640 = vpop.xlane.xlu0 %639
          %v642 = vlaneseq
          %v643 = vshrl.u32 %v642, 7
          %v644 = vsub.s32 0, %v643
          %v645 = vrot.slane %v640, %v644
          %v646 = vlaneseq
          %v647 = vshrl.u32 %v646, 7
          %v648 = vsub.s32 1, %v647
          %v649 = vrot.slane %v640, %v648
          %v650 = vlaneseq
          %v651 = vshrl.u32 %v650, 7
          %v652 = vsub.s32 2, %v651
          %v653 = vrot.slane %v640, %v652
          %v654 = vlaneseq
          %v655 = vshrl.u32 %v654, 7
          %v656 = vsub.s32 3, %v655
          %v657 = vrot.slane %v640, %v656
          %v658 = vlaneseq
          %v659 = vshrl.u32 %v658, 7
          %v660 = vsub.s32 4, %v659
          %v661 = vrot.slane %v640, %v660
          %v662 = vlaneseq
          %v663 = vshrl.u32 %v662, 7
          %v664 = vsub.s32 5, %v663
          %v665 = vrot.slane %v640, %v664
          %v666 = vlaneseq
          %v667 = vshrl.u32 %v666, 7
          %v668 = vsub.s32 6, %v667
          %v669 = vrot.slane %v640, %v668
          %v670 = vlaneseq
          %v671 = vshrl.u32 %v670, 7
          %v672 = vsub.s32 7, %v671
          %v673 = vrot.slane %v640, %v672
          %v682 = vsub.f32 %v565, %v645
          %v683 = vsub.f32 %v567, %v649
          %v684 = vsub.f32 %v569, %v653
          %v685 = vsub.f32 %v571, %v657
          %v686 = vsub.f32 %v573, %v661
          %v687 = vsub.f32 %v575, %v665
          %v688 = vsub.f32 %v577, %v669
          %v689 = vsub.f32 %v579, %v673
          %v690 = vmul.f32 %v682, 1.442695
          %v691 = vpow.pop %v690
          %v692 = vmul.f32 %v683, 1.442695
          %v693 = vpow.pop %v692
          %v694 = vmul.f32 %v684, 1.442695
          %v695 = vpow.pop %v694
          %v696 = vmul.f32 %v685, 1.442695
          %v697 = vpow.pop %v696
          %v698 = vmul.f32 %v686, 1.442695
          %v699 = vpow.pop %v698
          %v700 = vmul.f32 %v687, 1.442695
          %v701 = vpow.pop %v700
          %v702 = vmul.f32 %v688, 1.442695
          %v703 = vpow.pop %v702
          %v704 = vmul.f32 %v689, 1.442695
          %v705 = vpow.pop %v704
          %714 = vset.pattern.permute.xlu0 0
          %715 = vperm.xlu0 %714, %v691
          %v716 = vpop.permute.xlu0 %715
          %717 = vset.pattern.permute.xlu0 0
          %718 = vperm.xlu0 %717, %v693
          %v719 = vpop.permute.xlu0 %718
          %720 = vset.pattern.permute.xlu0 0
          %721 = vperm.xlu0 %720, %v695
          %v722 = vpop.permute.xlu0 %721
          %723 = vset.pattern.permute.xlu0 0
          %724 = vperm.xlu0 %723, %v697
          %v725 = vpop.permute.xlu0 %724
          %726 = vset.pattern.permute.xlu0 0
          %727 = vperm.xlu0 %726, %v699
          %v728 = vpop.permute.xlu0 %727
          %729 = vset.pattern.permute.xlu0 0
          %730 = vperm.xlu0 %729, %v701
          %v731 = vpop.permute.xlu0 %730
          %732 = vset.pattern.permute.xlu0 0
          %733 = vperm.xlu0 %732, %v703
          %v734 = vpop.permute.xlu0 %733
          %735 = vset.pattern.permute.xlu0 0
          %736 = vperm.xlu0 %735, %v705
          %v737 = vpop.permute.xlu0 %736
          %v738 = vlaneseq
          %v739 = vshrl.u32 %v738, 7
          %v740 = vsub.s32 %v589, %v739
          %v741 = vrot.slane %v716, %v740
          %v742 = vlaneseq
          %v743 = vshrl.u32 %v742, 7
          %v744 = vsub.s32 %v589, %v743
          %v745 = vrot.slane %v719, %v744
          %v746 = vlaneseq
          %v747 = vshrl.u32 %v746, 7
          %v748 = vsub.s32 %v589, %v747
          %v749 = vrot.slane %v722, %v748
          %v750 = vlaneseq
          %v751 = vshrl.u32 %v750, 7
          %v752 = vsub.s32 %v589, %v751
          %v753 = vrot.slane %v725, %v752
          %v754 = vlaneseq
          %v755 = vshrl.u32 %v754, 7
          %v756 = vsub.s32 %v589, %v755
          %v757 = vrot.slane %v728, %v756
          %v758 = vlaneseq
          %v759 = vshrl.u32 %v758, 7
          %v760 = vsub.s32 %v589, %v759
          %v761 = vrot.slane %v731, %v760
          %v762 = vlaneseq
          %v763 = vshrl.u32 %v762, 7
          %v764 = vsub.s32 %v589, %v763
          %v765 = vrot.slane %v734, %v764
          %v766 = vlaneseq
          %v767 = vshrl.u32 %v766, 7
          %v768 = vsub.s32 %v589, %v767
          %v769 = vrot.slane %v737, %v768
          %v770 = vsel %vm622, %v745, %v741
          %v771 = vsel %vm624, %v749, %v770
          %v772 = vsel %vm626, %v753, %v771
          %v773 = vsel %vm628, %v757, %v772
          %v774 = vsel %vm630, %v761, %v773
          %v775 = vsel %vm632, %v765, %v774
          %v776 = vsel %vm634, %v769, %v775
          %v778 = vsel %vm637, %v776, 0.0
          %779 = vadd.xlane.f32.xlu0 %v778
          %v780 = vpop.xlane.xlu0 %779
          %v782 = vlaneseq
          %v783 = vshrl.u32 %v782, 7
          %v784 = vsub.s32 0, %v783
          %v785 = vrot.slane %v780, %v784
          %v786 = vlaneseq
          %v787 = vshrl.u32 %v786, 7
          %v788 = vsub.s32 1, %v787
          %v789 = vrot.slane %v780, %v788
          %v790 = vlaneseq
          %v791 = vshrl.u32 %v790, 7
          %v792 = vsub.s32 2, %v791
          %v793 = vrot.slane %v780, %v792
          %v794 = vlaneseq
          %v795 = vshrl.u32 %v794, 7
          %v796 = vsub.s32 3, %v795
          %v797 = vrot.slane %v780, %v796
          %v798 = vlaneseq
          %v799 = vshrl.u32 %v798, 7
          %v800 = vsub.s32 4, %v799
          %v801 = vrot.slane %v780, %v800
          %v802 = vlaneseq
          %v803 = vshrl.u32 %v802, 7
          %v804 = vsub.s32 5, %v803
          %v805 = vrot.slane %v780, %v804
          %v806 = vlaneseq
          %v807 = vshrl.u32 %v806, 7
          %v808 = vsub.s32 6, %v807
          %v809 = vrot.slane %v780, %v808
          %v810 = vlaneseq
          %v811 = vshrl.u32 %v810, 7
          %v812 = vsub.s32 7, %v811
          %v813 = vrot.slane %v780, %v812
          %v822 = vrcp.pop %v785
          %v823 = vmul.f32 %v691, %v822
          %v824 = vrcp.pop %v789
          %v825 = vmul.f32 %v693, %v824
          %v826 = vrcp.pop %v793
          %v827 = vmul.f32 %v695, %v826
          %v828 = vrcp.pop %v797
          %v829 = vmul.f32 %v697, %v828
          %v830 = vrcp.pop %v801
          %v831 = vmul.f32 %v699, %v830
          %v832 = vrcp.pop %v805
          %v833 = vmul.f32 %v701, %v832
          %v834 = vrcp.pop %v809
          %v835 = vmul.f32 %v703, %v834
          %v836 = vrcp.pop %v813
          %v837 = vmul.f32 %v705, %v836
          %839 = vset.pattern.permute.xlu0 0
          %840 = vperm.xlu0 %839, %v823
          %v841 = vpop.permute.xlu0 %840
          %844 = vset.pattern.permute.xlu0 0
          %845 = vperm.xlu0 %844, %v825
          %v846 = vpop.permute.xlu0 %845
          %849 = vset.pattern.permute.xlu0 0
          %850 = vperm.xlu0 %849, %v827
          %v851 = vpop.permute.xlu0 %850
          %854 = vset.pattern.permute.xlu0 0
          %855 = vperm.xlu0 %854, %v829
          %v856 = vpop.permute.xlu0 %855
          %859 = vset.pattern.permute.xlu0 0
          %860 = vperm.xlu0 %859, %v831
          %v861 = vpop.permute.xlu0 %860
          %864 = vset.pattern.permute.xlu0 0
          %865 = vperm.xlu0 %864, %v833
          %v866 = vpop.permute.xlu0 %865
          %869 = vset.pattern.permute.xlu0 0
          %870 = vperm.xlu0 %869, %v835
          %v871 = vpop.permute.xlu0 %870
          %874 = vset.pattern.permute.xlu0 0
          %875 = vperm.xlu0 %874, %v837
          %v876 = vpop.permute.xlu0 %875
          %v878 = vmul.f32 %v841, %v541
          %v879 = vmul.f32 %v846, %v542
          %v880 = vmul.f32 %v851, %v543
          %v881 = vmul.f32 %v856, %v544
          %v882 = vmul.f32 %v861, %v545
          %v883 = vmul.f32 %v866, %v546
          %v884 = vmul.f32 %v871, %v547
          %v885 = vmul.f32 %v876, %v548
          %v886 = vrot.slane %v878, 4
          %v887 = vadd.f32 %v878, %v886
          %v888 = vrot.slane %v887, 2
          %v889 = vadd.f32 %v887, %v888
          %v890 = vrot.slane %v889, 1
          %v891 = vadd.f32 %v889, %v890
          %v892 = vrot.slane %v879, 4
          %v893 = vadd.f32 %v879, %v892
          %v894 = vrot.slane %v893, 2
          %v895 = vadd.f32 %v893, %v894
          %v896 = vrot.slane %v895, 1
          %v897 = vadd.f32 %v895, %v896
          %v898 = vrot.slane %v880, 4
          %v899 = vadd.f32 %v880, %v898
          %v900 = vrot.slane %v899, 2
          %v901 = vadd.f32 %v899, %v900
          %v902 = vrot.slane %v901, 1
          %v903 = vadd.f32 %v901, %v902
          %v904 = vrot.slane %v881, 4
          %v905 = vadd.f32 %v881, %v904
          %v906 = vrot.slane %v905, 2
          %v907 = vadd.f32 %v905, %v906
          %v908 = vrot.slane %v907, 1
          %v909 = vadd.f32 %v907, %v908
          %v910 = vrot.slane %v882, 4
          %v911 = vadd.f32 %v882, %v910
          %v912 = vrot.slane %v911, 2
          %v913 = vadd.f32 %v911, %v912
          %v914 = vrot.slane %v913, 1
          %v915 = vadd.f32 %v913, %v914
          %v916 = vrot.slane %v883, 4
          %v917 = vadd.f32 %v883, %v916
          %v918 = vrot.slane %v917, 2
          %v919 = vadd.f32 %v917, %v918
          %v920 = vrot.slane %v919, 1
          %v921 = vadd.f32 %v919, %v920
          %v922 = vrot.slane %v884, 4
          %v923 = vadd.f32 %v884, %v922
          %v924 = vrot.slane %v923, 2
          %v925 = vadd.f32 %v923, %v924
          %v926 = vrot.slane %v925, 1
          %v927 = vadd.f32 %v925, %v926
          %v928 = vrot.slane %v885, 4
          %v929 = vadd.f32 %v885, %v928
          %v930 = vrot.slane %v929, 2
          %v931 = vadd.f32 %v929, %v930
          %v932 = vrot.slane %v931, 1
          %v933 = vadd.f32 %v931, %v932
          %v942 = vsel %vm622, %v897, %v891
          %v943 = vsel %vm624, %v903, %v942
          %v944 = vsel %vm626, %v909, %v943
          %v945 = vsel %vm628, %v915, %v944
          %v946 = vsel %vm630, %v921, %v945
          %v947 = vsel %vm632, %v927, %v946
          %v948 = vsel %vm634, %v933, %v947
          %950 = vst [vmem:[#allocation2] sm:$0xff] %v948
        $region100: #{decoder_decode.1} parent=67 // pred_fallthru
          _
        %v951 = vld [vmem:[%s532] sm:$0xff]
        %v952 = vld [vmem:[#allocation2] sm:$0xff]
        %v953 = vld [vmem:[#allocation16] sm:$0xff]
        %v954 = vadd.f32 %v953, %v952
        %v955 = vld [vmem:[#allocation8] sm:$0xff]
        %v956 = vld [vmem:[#allocation8 + $0x8] sm:$0xff]
        %v957 = vld [vmem:[#allocation8 + $0x10] sm:$0xff]
        %v958 = vld [vmem:[#allocation8 + $0x18] sm:$0xff]
        %v959 = vld [vmem:[#allocation8 + $0x20] sm:$0xff]
        %v960 = vld [vmem:[#allocation8 + $0x28] sm:$0xff]
        %v961 = vld [vmem:[#allocation8 + $0x30] sm:$0xff]
        %v962 = vld [vmem:[#allocation8 + $0x38] sm:$0xff]
        %v963 = vld [vmem:[#allocation8 + $0x40] sm:$0xff]
        %v964 = vld [vmem:[#allocation8 + $0x48] sm:$0xff]
        %v965 = vld [vmem:[#allocation8 + $0x50] sm:$0xff]
        %v966 = vld [vmem:[#allocation8 + $0x58] sm:$0xff]
        %v967 = vld [vmem:[#allocation9] ss:$2 sm:$0x7]
        %v969 = vlaneseq
        %v970 = vshrl.u32 %v969, 7
        %v971 = vsub.s32 0, %v970
        %v972 = vrot.slane %v967, %v971
        %v973 = vlaneseq
        %v974 = vshrl.u32 %v973, 7
        %v975 = vsub.s32 1, %v974
        %v976 = vrot.slane %v967, %v975
        %v977 = vlaneseq
        %v978 = vshrl.u32 %v977, 7
        %v979 = vsub.s32 2, %v978
        %v980 = vrot.slane %v967, %v979
        %vm984 = vcmask 261120
        %v986 = vsel %vm984, %v951, 0
        %988 = vmatprep.subr.mxu0 %v956
        %989 = vmatpush1.msra.mxu0 %v955
        %990 = vmatprep.subr.mxu0 %v959
        %991 = vmatpush1.msra.mxu0 %v958
        %992 = vmatprep.subr.mxu0 %v962
        %993 = vmatpush1.msra.mxu0 %v961
        %994 = vmatprep.subr.mxu0 %v965
        %995 = vmatpush1.msra.mxu0 %v964
        %996 = vmatprep.subr.mxu0 0.0
        %997 = vmatpush1.msra.mxu0 0.0
        %998 = vmatprep.subr.mxu0 0.0
        %999 = vmatpush1.msra.mxu0 0.0
        %1000 = vmatprep.subr.mxu0 0.0
        %1001 = vmatpush1.msra.mxu0 0.0
        %1002 = vmatprep.subr.mxu0 0.0
        %1003 = vmatpush1.msra.mxu0 0.0
        %1004 = vmatprep.subr.mxu0 0.0
        %1005 = vmatpush1.msra.mxu0 0.0
        %1006 = vmatprep.subr.mxu0 0.0
        %1007 = vmatpush1.msra.mxu0 0.0
        %1008 = vmatprep.subr.mxu0 0.0
        %1009 = vmatpush1.msra.mxu0 0.0
        %1010 = vmatprep.subr.mxu0 0.0
        %1011 = vmatpush1.msra.mxu0 0.0
        %1012 = vmatprep.subr.mxu0 0.0
        %1013 = vmatpush1.msra.mxu0 0.0
        %1014 = vmatprep.subr.mxu0 0.0
        %1015 = vmatpush1.msra.mxu0 0.0
        %1016 = vmatprep.subr.mxu0 0.0
        %1017 = vmatpush1.msra.mxu0 0.0
        %1018 = vmatprep.subr.mxu0 0.0
        %1019 = vmatpush1.msra.mxu0 0.0
        %1020 = vmatprep.subr.mxu0 0.0
        %1021 = vmatpush1.msra.mxu0 0.0
        %1022 = vmatprep.subr.mxu0 0.0
        %1023 = vmatpush1.msra.mxu0 0.0
        %1024 = vmatprep.subr.mxu0 0.0
        %1025 = vmatpush1.msra.mxu0 0.0
        %1026 = vmatprep.subr.mxu0 0.0
        %1027 = vmatpush1.msra.mxu0 0.0
        %1028 = vmatprep.subr.mxu0 0.0
        %1029 = vmatpush1.msra.mxu0 0.0
        %1030 = vmatprep.subr.mxu0 0.0
        %1031 = vmatpush1.msra.mxu0 0.0
        %1032 = vmatprep.subr.mxu0 0.0
        %1033 = vmatpush1.msra.mxu0 0.0
        %1034 = vmatprep.subr.mxu0 0.0
        %1035 = vmatpush1.msra.mxu0 0.0
        %1036 = vmatprep.subr.mxu0 0.0
        %1037 = vmatpush1.msra.mxu0 0.0
        %1038 = vmatprep.subr.mxu0 0.0
        %1039 = vmatpush1.msra.mxu0 0.0
        %1040 = vmatprep.subr.mxu0 0.0
        %1041 = vmatpush1.msra.mxu0 0.0
        %1042 = vmatprep.subr.mxu0 0.0
        %1043 = vmatpush1.msra.mxu0 0.0
        %1044 = vmatprep.subr.mxu0 0.0
        %1045 = vmatpush1.msra.mxu0 0.0
        %1046 = vmatprep.subr.mxu0 0.0
        %1047 = vmatpush1.msra.mxu0 0.0
        %1048 = vmatprep.subr.mxu0 0.0
        %1049 = vmatpush1.msra.mxu0 0.0
        %1050 = vmatprep.subr.mxu0 0.0
        %1051 = vmatpush1.msra.mxu0 0.0
        %1052 = vmatprep.mubr.f32.mxu0 0.0
        %1053 = vmatmul.mubr.f32.gmra.mrb[0].mxu0 %v986
        %v1054 = vpop.f32.mrb[0].mxu0
        %v1055 = vadd.f32 %v972, %v1054
        %v1056 = vpop.f32.mrb[0].mxu0
        %v1057 = vadd.f32 %v976, %v1056
        %1058 = vdwg.mxu0
        %1059 = vmatprep.subr.mxu0 0.0
        %1060 = vmatpush1.msra.mxu0 %v957
        %1061 = vmatprep.subr.mxu0 0.0
        %1062 = vmatpush1.msra.mxu0 %v960
        %1063 = vmatprep.subr.mxu0 0.0
        %1064 = vmatpush1.msra.mxu0 %v963
        %1065 = vmatprep.subr.mxu0 0.0
        %1066 = vmatpush1.msra.mxu0 %v966
        %1067 = vmatprep.subr.mxu0 0.0
        %1068 = vmatpush1.msra.mxu0 0.0
        %1069 = vmatprep.subr.mxu0 0.0
        %1070 = vmatpush1.msra.mxu0 0.0
        %1071 = vmatprep.subr.mxu0 0.0
        %1072 = vmatpush1.msra.mxu0 0.0
        %1073 = vmatprep.subr.mxu0 0.0
        %1074 = vmatpush1.msra.mxu0 0.0
        %1075 = vmatprep.subr.mxu0 0.0
        %1076 = vmatpush1.msra.mxu0 0.0
        %1077 = vmatprep.subr.mxu0 0.0
        %1078 = vmatpush1.msra.mxu0 0.0
        %1079 = vmatprep.subr.mxu0 0.0
        %1080 = vmatpush1.msra.mxu0 0.0
        %1081 = vmatprep.subr.mxu0 0.0
        %1082 = vmatpush1.msra.mxu0 0.0
        %1083 = vmatprep.subr.mxu0 0.0
        %1084 = vmatpush1.msra.mxu0 0.0
        %1085 = vmatprep.subr.mxu0 0.0
        %1086 = vmatpush1.msra.mxu0 0.0
        %1087 = vmatprep.subr.mxu0 0.0
        %1088 = vmatpush1.msra.mxu0 0.0
        %1089 = vmatprep.subr.mxu0 0.0
        %1090 = vmatpush1.msra.mxu0 0.0
        %1091 = vmatprep.subr.mxu0 0.0
        %1092 = vmatpush1.msra.mxu0 0.0
        %1093 = vmatprep.subr.mxu0 0.0
        %1094 = vmatpush1.msra.mxu0 0.0
        %1095 = vmatprep.subr.mxu0 0.0
        %1096 = vmatpush1.msra.mxu0 0.0
        %1097 = vmatprep.subr.mxu0 0.0
        %1098 = vmatpush1.msra.mxu0 0.0
        %1099 = vmatprep.subr.mxu0 0.0
        %1100 = vmatpush1.msra.mxu0 0.0
        %1101 = vmatprep.subr.mxu0 0.0
        %1102 = vmatpush1.msra.mxu0 0.0
        %1103 = vmatprep.subr.mxu0 0.0
        %1104 = vmatpush1.msra.mxu0 0.0
        %1105 = vmatprep.subr.mxu0 0.0
        %1106 = vmatpush1.msra.mxu0 0.0
        %1107 = vmatprep.subr.mxu0 0.0
        %1108 = vmatpush1.msra.mxu0 0.0
        %1109 = vmatprep.subr.mxu0 0.0
        %1110 = vmatpush1.msra.mxu0 0.0
        %1111 = vmatprep.subr.mxu0 0.0
        %1112 = vmatpush1.msra.mxu0 0.0
        %1113 = vmatprep.subr.mxu0 0.0
        %1114 = vmatpush1.msra.mxu0 0.0
        %1115 = vmatprep.subr.mxu0 0.0
        %1116 = vmatpush1.msra.mxu0 0.0
        %1117 = vmatprep.subr.mxu0 0.0
        %1118 = vmatpush1.msra.mxu0 0.0
        %1119 = vmatprep.subr.mxu0 0.0
        %1120 = vmatpush1.msra.mxu0 0.0
        %1121 = vmatprep.subr.mxu0 0.0
        %1122 = vmatpush1.msra.mxu0 0.0
        %1123 = vmatprep.mubr.f32.mxu0 0.0
        %1124 = vmatmul.mubr.f32.gmra.mrb[0].mxu0 %v986
        %v1125 = vpop.f32.mrb[0].mxu0
        %v1126 = vadd.f32 %v980, %v1125
        %v1127 = vpop.f32.mrb[0].mxu0
        %1128 = vdwg.mxu0
        %v1129 = vld [vmem:[%s5] sm:$0xff]
        %v1130 = vld [vmem:[%s5 + $0x8] sm:$0xff]
        %v1131 = vld [vmem:[%s5 + $0x10] sm:$0xff]
        %v1132 = vld [vmem:[%s5 + $0x18] sm:$0xff]
        %v1133 = vld [vmem:[%s5 + $0x20] sm:$0xff]
        %v1134 = vld [vmem:[%s5 + $0x28] sm:$0xff]
        %v1135 = vld [vmem:[%s5 + $0x30] sm:$0xff]
        %v1136 = vld [vmem:[%s5 + $0x38] sm:$0xff]
        %v1137 = vld [vmem:[%s5 + $0x40] sm:$0xff]
        %v1138 = vld [vmem:[%s5 + $0x48] sm:$0xff]
        %v1139 = vld [vmem:[%s5 + $0x50] sm:$0xff]
        %v1140 = vld [vmem:[%s5 + $0x58] sm:$0xff]
        %v1141 = vld [vmem:[%s5 + $0x60] sm:$0xff]
        %v1142 = vld [vmem:[%s5 + $0x68] sm:$0xff]
        %v1143 = vld [vmem:[%s5 + $0x70] sm:$0xff]
        %v1144 = vld [vmem:[%s5 + $0x78] sm:$0xff]
        %v1145 = vld [vmem:[%s5 + $0x80] sm:$0xff]
        %v1146 = vld [vmem:[%s5 + $0x88] sm:$0xff]
        %v1147 = vld [vmem:[%s5 + $0x90] sm:$0xff]
        %v1148 = vld [vmem:[%s5 + $0x98] sm:$0xff]
        %v1149 = vld [vmem:[%s5 + $0xa0] sm:$0xff]
        %v1150 = vld [vmem:[%s5 + $0xa8] sm:$0xff]
        %v1151 = vld [vmem:[%s5 + $0xb0] sm:$0xff]
        %v1152 = vld [vmem:[%s5 + $0xb8] sm:$0xff]
        %v1153 = vld [vmem:[%s5 + $0xc0] sm:$0xff]
        %v1154 = vld [vmem:[%s5 + $0xc8] sm:$0xff]
        %v1155 = vld [vmem:[%s5 + $0xd0] sm:$0xff]
        %v1156 = vld [vmem:[%s5 + $0xd8] sm:$0xff]
        %v1157 = vld [vmem:[%s5 + $0xe0] sm:$0xff]
        %v1158 = vld [vmem:[%s5 + $0xe8] sm:$0xff]
        %v1159 = vld [vmem:[%s5 + $0xf0] sm:$0xff]
        %v1160 = vld [vmem:[%s5 + $0xf8] sm:$0xff]
        %v1161 = vld [vmem:[%s5 + $0x100] sm:$0xff]
        %v1162 = vld [vmem:[%s5 + $0x108] sm:$0xff]
        %v1163 = vld [vmem:[%s5 + $0x110] sm:$0xff]
        %v1164 = vld [vmem:[%s5 + $0x118] sm:$0xff]
        %v1165 = vld [vmem:[%s5 + $0x120] sm:$0xff]
        %v1166 = vld [vmem:[%s5 + $0x128] sm:$0xff]
        %v1167 = vld [vmem:[%s5 + $0x130] sm:$0xff]
        %v1168 = vld [vmem:[%s5 + $0x138] sm:$0xff]
        %v1169 = vld [vmem:[%s5 + $0x140] sm:$0xff]
        %v1170 = vld [vmem:[%s5 + $0x148] sm:$0xff]
        %v1171 = vld [vmem:[%s5 + $0x150] sm:$0xff]
        %v1172 = vld [vmem:[%s5 + $0x158] sm:$0xff]
        %v1173 = vld [vmem:[%s5 + $0x160] sm:$0xff]
        %v1174 = vld [vmem:[%s5 + $0x168] sm:$0xff]
        %v1175 = vld [vmem:[%s5 + $0x170] sm:$0xff]
        %v1176 = vld [vmem:[%s5 + $0x178] sm:$0xff]
        %s1177 = scalar_lea.vmem [#allocation9], 1
        %v1178 = vld [vmem:[%s1177] ss:$2 sm:$0x7]
        %v1180 = vlaneseq
        %v1181 = vshrl.u32 %v1180, 7
        %v1182 = vsub.s32 0, %v1181
        %v1183 = vrot.slane %v1178, %v1182
        %v1184 = vlaneseq
        %v1185 = vshrl.u32 %v1184, 7
        %v1186 = vsub.s32 1, %v1185
        %v1187 = vrot.slane %v1178, %v1186
        %v1188 = vlaneseq
        %v1189 = vshrl.u32 %v1188, 7
        %v1190 = vsub.s32 2, %v1189
        %v1191 = vrot.slane %v1178, %v1190
        %1195 = vmatprep.subr.mxu0 %v1130
        %1196 = vmatpush1.msra.mxu0 %v1129
        %1197 = vmatprep.subr.mxu0 %v1133
        %1198 = vmatpush1.msra.mxu0 %v1132
        %1199 = vmatprep.subr.mxu0 %v1136
        %1200 = vmatpush1.msra.mxu0 %v1135
        %1201 = vmatprep.subr.mxu0 %v1139
        %1202 = vmatpush1.msra.mxu0 %v1138
        %1203 = vmatprep.subr.mxu0 %v1142
        %1204 = vmatpush1.msra.mxu0 %v1141
        %1205 = vmatprep.subr.mxu0 %v1145
        %1206 = vmatpush1.msra.mxu0 %v1144
        %1207 = vmatprep.subr.mxu0 %v1148
        %1208 = vmatpush1.msra.mxu0 %v1147
        %1209 = vmatprep.subr.mxu0 %v1151
        %1210 = vmatpush1.msra.mxu0 %v1150
        %1211 = vmatprep.subr.mxu0 %v1154
        %1212 = vmatpush1.msra.mxu0 %v1153
        %1213 = vmatprep.subr.mxu0 %v1157
        %1214 = vmatpush1.msra.mxu0 %v1156
        %1215 = vmatprep.subr.mxu0 %v1160
        %1216 = vmatpush1.msra.mxu0 %v1159
        %1217 = vmatprep.subr.mxu0 %v1163
        %1218 = vmatpush1.msra.mxu0 %v1162
        %1219 = vmatprep.subr.mxu0 %v1166
        %1220 = vmatpush1.msra.mxu0 %v1165
        %1221 = vmatprep.subr.mxu0 %v1169
        %1222 = vmatpush1.msra.mxu0 %v1168
        %1223 = vmatprep.subr.mxu0 %v1172
        %1224 = vmatpush1.msra.mxu0 %v1171
        %1225 = vmatprep.subr.mxu0 %v1175
        %1226 = vmatpush1.msra.mxu0 %v1174
        %1227 = vmatprep.subr.mxu0 0.0
        %1228 = vmatpush1.msra.mxu0 0.0
        %1229 = vmatprep.subr.mxu0 0.0
        %1230 = vmatpush1.msra.mxu0 0.0
        %1231 = vmatprep.subr.mxu0 0.0
        %1232 = vmatpush1.msra.mxu0 0.0
        %1233 = vmatprep.subr.mxu0 0.0
        %1234 = vmatpush1.msra.mxu0 0.0
        %1235 = vmatprep.subr.mxu0 0.0
        %1236 = vmatpush1.msra.mxu0 0.0
        %1237 = vmatprep.subr.mxu0 0.0
        %1238 = vmatpush1.msra.mxu0 0.0
        %1239 = vmatprep.subr.mxu0 0.0
        %1240 = vmatpush1.msra.mxu0 0.0
        %1241 = vmatprep.subr.mxu0 0.0
        %1242 = vmatpush1.msra.mxu0 0.0
        %1243 = vmatprep.subr.mxu0 0.0
        %1244 = vmatpush1.msra.mxu0 0.0
        %1245 = vmatprep.subr.mxu0 0.0
        %1246 = vmatpush1.msra.mxu0 0.0
        %1247 = vmatprep.subr.mxu0 0.0
        %1248 = vmatpush1.msra.mxu0 0.0
        %1249 = vmatprep.subr.mxu0 0.0
        %1250 = vmatpush1.msra.mxu0 0.0
        %1251 = vmatprep.subr.mxu0 0.0
        %1252 = vmatpush1.msra.mxu0 0.0
        %1253 = vmatprep.subr.mxu0 0.0
        %1254 = vmatpush1.msra.mxu0 0.0
        %1255 = vmatprep.subr.mxu0 0.0
        %1256 = vmatpush1.msra.mxu0 0.0
        %1257 = vmatprep.subr.mxu0 0.0
        %1258 = vmatpush1.msra.mxu0 0.0
        %1259 = vmatprep.mubr.f32.mxu0 0.0
        %1260 = vmatmul.mubr.f32.gmra.mrb[0].mxu0 %v954
        %v1261 = vpop.f32.mrb[0].mxu0
        %v1262 = vadd.f32 %v1183, %v1261
        %v1263 = vpop.f32.mrb[0].mxu0
        %v1264 = vadd.f32 %v1187, %v1263
        %1265 = vdwg.mxu0
        %1266 = vmatprep.subr.mxu0 0.0
        %1267 = vmatpush1.msra.mxu0 %v1131
        %1268 = vmatprep.subr.mxu0 0.0
        %1269 = vmatpush1.msra.mxu0 %v1134
        %1270 = vmatprep.subr.mxu0 0.0
        %1271 = vmatpush1.msra.mxu0 %v1137
        %1272 = vmatprep.subr.mxu0 0.0
        %1273 = vmatpush1.msra.mxu0 %v1140
        %1274 = vmatprep.subr.mxu0 0.0
        %1275 = vmatpush1.msra.mxu0 %v1143
        %1276 = vmatprep.subr.mxu0 0.0
        %1277 = vmatpush1.msra.mxu0 %v1146
        %1278 = vmatprep.subr.mxu0 0.0
        %1279 = vmatpush1.msra.mxu0 %v1149
        %1280 = vmatprep.subr.mxu0 0.0
        %1281 = vmatpush1.msra.mxu0 %v1152
        %1282 = vmatprep.subr.mxu0 0.0
        %1283 = vmatpush1.msra.mxu0 %v1155
        %1284 = vmatprep.subr.mxu0 0.0
        %1285 = vmatpush1.msra.mxu0 %v1158
        %1286 = vmatprep.subr.mxu0 0.0
        %1287 = vmatpush1.msra.mxu0 %v1161
        %1288 = vmatprep.subr.mxu0 0.0
        %1289 = vmatpush1.msra.mxu0 %v1164
        %1290 = vmatprep.subr.mxu0 0.0
        %1291 = vmatpush1.msra.mxu0 %v1167
        %1292 = vmatprep.subr.mxu0 0.0
        %1293 = vmatpush1.msra.mxu0 %v1170
        %1294 = vmatprep.subr.mxu0 0.0
        %1295 = vmatpush1.msra.mxu0 %v1173
        %1296 = vmatprep.subr.mxu0 0.0
        %1297 = vmatpush1.msra.mxu0 %v1176
        %1298 = vmatprep.subr.mxu0 0.0
        %1299 = vmatpush1.msra.mxu0 0.0
        %1300 = vmatprep.subr.mxu0 0.0
        %1301 = vmatpush1.msra.mxu0 0.0
        %1302 = vmatprep.subr.mxu0 0.0
        %1303 = vmatpush1.msra.mxu0 0.0
        %1304 = vmatprep.subr.mxu0 0.0
        %1305 = vmatpush1.msra.mxu0 0.0
        %1306 = vmatprep.subr.mxu0 0.0
        %1307 = vmatpush1.msra.mxu0 0.0
        %1308 = vmatprep.subr.mxu0 0.0
        %1309 = vmatpush1.msra.mxu0 0.0
        %1310 = vmatprep.subr.mxu0 0.0
        %1311 = vmatpush1.msra.mxu0 0.0
        %1312 = vmatprep.subr.mxu0 0.0
        %1313 = vmatpush1.msra.mxu0 0.0
        %1314 = vmatprep.subr.mxu0 0.0
        %1315 = vmatpush1.msra.mxu0 0.0
        %1316 = vmatprep.subr.mxu0 0.0
        %1317 = vmatpush1.msra.mxu0 0.0
        %1318 = vmatprep.subr.mxu0 0.0
        %1319 = vmatpush1.msra.mxu0 0.0
        %1320 = vmatprep.subr.mxu0 0.0
        %1321 = vmatpush1.msra.mxu0 0.0
        %1322 = vmatprep.subr.mxu0 0.0
        %1323 = vmatpush1.msra.mxu0 0.0
        %1324 = vmatprep.subr.mxu0 0.0
        %1325 = vmatpush1.msra.mxu0 0.0
        %1326 = vmatprep.subr.mxu0 0.0
        %1327 = vmatpush1.msra.mxu0 0.0
        %1328 = vmatprep.subr.mxu0 0.0
        %1329 = vmatpush1.msra.mxu0 0.0
        %1330 = vmatprep.mubr.f32.mxu0 0.0
        %1331 = vmatmul.mubr.f32.gmra.mrb[0].mxu0 %v954
        %v1332 = vpop.f32.mrb[0].mxu0
        %v1333 = vadd.f32 %v1191, %v1332
        %v1334 = vpop.f32.mrb[0].mxu0
        %1335 = vdwg.mxu0
        %v1336 = vadd.f32 %v1055, %v1262
        %v1337 = vxor.u32 %v1336, 2147483648
        %v1338 = vmul.f32 %v1337, 1.442695
        %v1339 = vpow.pop %v1338
        %v1340 = vadd.f32 %v1339, 1.0
        %v1341 = vrcp.pop %v1340
        %v1342 = vmul.f32 1.0, %v1341
        %v1343 = vadd.f32 %v1057, %v1264
        %v1344 = vxor.u32 %v1343, 2147483648
        %v1345 = vmul.f32 %v1344, 1.442695
        %v1346 = vpow.pop %v1345
        %v1347 = vadd.f32 %v1346, 1.0
        %v1348 = vrcp.pop %v1347
        %v1349 = vmul.f32 1.0, %v1348
        %v1350 = vmul.f32 %v1342, %v1333
        %v1351 = vadd.f32 %v1126, %v1350
        %v1352 = vtanh.pop %v1351
        %v1353 = vsub.f32 1.0, %v1349
        %v1354 = vmul.f32 %v1353, %v1352
        %v1355 = vmul.f32 %v1349, %v954
        %v1356 = vadd.f32 %v1354, %v1355
        %1357 = vst [vmem:[#allocation16] sm:$0xff] %v1356
        %s1358 = scalar_lea.vmem [#allocation16], 8
        %v1359 = vld [vmem:[%s1358] sm:$0xff]
        %v1360 = vadd.f32 %v1359, %v952
        %v1361 = vld [vmem:[%s7] sm:$0xff]
        %v1362 = vld [vmem:[%s7 + $0x8] sm:$0xff]
        %v1363 = vld [vmem:[%s7 + $0x10] sm:$0xff]
        %v1364 = vld [vmem:[%s7 + $0x18] sm:$0xff]
        %v1365 = vld [vmem:[%s7 + $0x20] sm:$0xff]
        %v1366 = vld [vmem:[%s7 + $0x28] sm:$0xff]
        %v1367 = vld [vmem:[%s7 + $0x30] sm:$0xff]
        %v1368 = vld [vmem:[%s7 + $0x38] sm:$0xff]
        %v1369 = vld [vmem:[%s7 + $0x40] sm:$0xff]
        %v1370 = vld [vmem:[%s7 + $0x48] sm:$0xff]
        %v1371 = vld [vmem:[%s7 + $0x50] sm:$0xff]
        %v1372 = vld [vmem:[%s7 + $0x58] sm:$0xff]
        %v1373 = vld [vmem:[%s7 + $0x60] sm:$0xff]
        %v1374 = vld [vmem:[%s7 + $0x68] sm:$0xff]
        %v1375 = vld [vmem:[%s7 + $0x70] sm:$0xff]
        %v1376 = vld [vmem:[%s7 + $0x78] sm:$0xff]
        %v1377 = vld [vmem:[%s7 + $0x80] sm:$0xff]
        %v1378 = vld [vmem:[%s7 + $0x88] sm:$0xff]
        %v1379 = vld [vmem:[%s7 + $0x90] sm:$0xff]
        %v1380 = vld [vmem:[%s7 + $0x98] sm:$0xff]
        %v1381 = vld [vmem:[%s7 + $0xa0] sm:$0xff]
        %v1382 = vld [vmem:[%s7 + $0xa8] sm:$0xff]
        %v1383 = vld [vmem:[%s7 + $0xb0] sm:$0xff]
        %v1384 = vld [vmem:[%s7 + $0xb8] sm:$0xff]
        %v1385 = vld [vmem:[%s7 + $0xc0] sm:$0xff]
        %v1386 = vld [vmem:[%s7 + $0xc8] sm:$0xff]
        %v1387 = vld [vmem:[%s7 + $0xd0] sm:$0xff]
        %v1388 = vld [vmem:[%s7 + $0xd8] sm:$0xff]
        %v1389 = vld [vmem:[%s7 + $0xe0] sm:$0xff]
        %v1390 = vld [vmem:[%s7 + $0xe8] sm:$0xff]
        %v1391 = vld [vmem:[%s7 + $0xf0] sm:$0xff]
        %v1392 = vld [vmem:[%s7 + $0xf8] sm:$0xff]
        %v1393 = vld [vmem:[%s7 + $0x100] sm:$0xff]
        %v1394 = vld [vmem:[%s7 + $0x108] sm:$0xff]
        %v1395 = vld [vmem:[%s7 + $0x110] sm:$0xff]
        %v1396 = vld [vmem:[%s7 + $0x118] sm:$0xff]
        %v1397 = vld [vmem:[%s7 + $0x120] sm:$0xff]
        %v1398 = vld [vmem:[%s7 + $0x128] sm:$0xff]
        %v1399 = vld [vmem:[%s7 + $0x130] sm:$0xff]
        %v1400 = vld [vmem:[%s7 + $0x138] sm:$0xff]
        %v1401 = vld [vmem:[%s7 + $0x140] sm:$0xff]
        %v1402 = vld [vmem:[%s7 + $0x148] sm:$0xff]
        %v1403 = vld [vmem:[%s7 + $0x150] sm:$0xff]
        %v1404 = vld [vmem:[%s7 + $0x158] sm:$0xff]
        %v1405 = vld [vmem:[%s7 + $0x160] sm:$0xff]
        %v1406 = vld [vmem:[%s7 + $0x168] sm:$0xff]
        %v1407 = vld [vmem:[%s7 + $0x170] sm:$0xff]
        %v1408 = vld [vmem:[%s7 + $0x178] sm:$0xff]
        %v1409 = vld [vmem:[#allocation12] ss:$2 sm:$0x7]
        %v1411 = vlaneseq
        %v1412 = vshrl.u32 %v1411, 7
        %v1413 = vsub.s32 0, %v1412
        %v1414 = vrot.slane %v1409, %v1413
        %v1415 = vlaneseq
        %v1416 = vshrl.u32 %v1415, 7
        %v1417 = vsub.s32 1, %v1416
        %v1418 = vrot.slane %v1409, %v1417
        %v1419 = vlaneseq
        %v1420 = vshrl.u32 %v1419, 7
        %v1421 = vsub.s32 2, %v1420
        %v1422 = vrot.slane %v1409, %v1421
        %1426 = vmatprep.subr.mxu0 %v1362
        %1427 = vmatpush1.msra.mxu0 %v1361
        %1428 = vmatprep.subr.mxu0 %v1365
        %1429 = vmatpush1.msra.mxu0 %v1364
        %1430 = vmatprep.subr.mxu0 %v1368
        %1431 = vmatpush1.msra.mxu0 %v1367
        %1432 = vmatprep.subr.mxu0 %v1371
        %1433 = vmatpush1.msra.mxu0 %v1370
        %1434 = vmatprep.subr.mxu0 %v1374
        %1435 = vmatpush1.msra.mxu0 %v1373
        %1436 = vmatprep.subr.mxu0 %v1377
        %1437 = vmatpush1.msra.mxu0 %v1376
        %1438 = vmatprep.subr.mxu0 %v1380
        %1439 = vmatpush1.msra.mxu0 %v1379
        %1440 = vmatprep.subr.mxu0 %v1383
        %1441 = vmatpush1.msra.mxu0 %v1382
        %1442 = vmatprep.subr.mxu0 %v1386
        %1443 = vmatpush1.msra.mxu0 %v1385
        %1444 = vmatprep.subr.mxu0 %v1389
        %1445 = vmatpush1.msra.mxu0 %v1388
        %1446 = vmatprep.subr.mxu0 %v1392
        %1447 = vmatpush1.msra.mxu0 %v1391
        %1448 = vmatprep.subr.mxu0 %v1395
        %1449 = vmatpush1.msra.mxu0 %v1394
        %1450 = vmatprep.subr.mxu0 %v1398
        %1451 = vmatpush1.msra.mxu0 %v1397
        %1452 = vmatprep.subr.mxu0 %v1401
        %1453 = vmatpush1.msra.mxu0 %v1400
        %1454 = vmatprep.subr.mxu0 %v1404
        %1455 = vmatpush1.msra.mxu0 %v1403
        %1456 = vmatprep.subr.mxu0 %v1407
        %1457 = vmatpush1.msra.mxu0 %v1406
        %1458 = vmatprep.subr.mxu0 0.0
        %1459 = vmatpush1.msra.mxu0 0.0
        %1460 = vmatprep.subr.mxu0 0.0
        %1461 = vmatpush1.msra.mxu0 0.0
        %1462 = vmatprep.subr.mxu0 0.0
        %1463 = vmatpush1.msra.mxu0 0.0
        %1464 = vmatprep.subr.mxu0 0.0
        %1465 = vmatpush1.msra.mxu0 0.0
        %1466 = vmatprep.subr.mxu0 0.0
        %1467 = vmatpush1.msra.mxu0 0.0
        %1468 = vmatprep.subr.mxu0 0.0
        %1469 = vmatpush1.msra.mxu0 0.0
        %1470 = vmatprep.subr.mxu0 0.0
        %1471 = vmatpush1.msra.mxu0 0.0
        %1472 = vmatprep.subr.mxu0 0.0
        %1473 = vmatpush1.msra.mxu0 0.0
        %1474 = vmatprep.subr.mxu0 0.0
        %1475 = vmatpush1.msra.mxu0 0.0
        %1476 = vmatprep.subr.mxu0 0.0
        %1477 = vmatpush1.msra.mxu0 0.0
        %1478 = vmatprep.subr.mxu0 0.0
        %1479 = vmatpush1.msra.mxu0 0.0
        %1480 = vmatprep.subr.mxu0 0.0
        %1481 = vmatpush1.msra.mxu0 0.0
        %1482 = vmatprep.subr.mxu0 0.0
        %1483 = vmatpush1.msra.mxu0 0.0
        %1484 = vmatprep.subr.mxu0 0.0
        %1485 = vmatpush1.msra.mxu0 0.0
        %1486 = vmatprep.subr.mxu0 0.0
        %1487 = vmatpush1.msra.mxu0 0.0
        %1488 = vmatprep.subr.mxu0 0.0
        %1489 = vmatpush1.msra.mxu0 0.0
        %1490 = vmatprep.mubr.f32.mxu0 0.0
        %1491 = vmatmul.mubr.f32.gmra.mrb[0].mxu0 %v1356
        %v1492 = vpop.f32.mrb[0].mxu0
        %v1493 = vadd.f32 %v1414, %v1492
        %v1494 = vpop.f32.mrb[0].mxu0
        %v1495 = vadd.f32 %v1418, %v1494
        %1496 = vdwg.mxu0
        %1497 = vmatprep.subr.mxu0 0.0
        %1498 = vmatpush1.msra.mxu0 %v1363
        %1499 = vmatprep.subr.mxu0 0.0
        %1500 = vmatpush1.msra.mxu0 %v1366
        %1501 = vmatprep.subr.mxu0 0.0
        %1502 = vmatpush1.msra.mxu0 %v1369
        %1503 = vmatprep.subr.mxu0 0.0
        %1504 = vmatpush1.msra.mxu0 %v1372
        %1505 = vmatprep.subr.mxu0 0.0
        %1506 = vmatpush1.msra.mxu0 %v1375
        %1507 = vmatprep.subr.mxu0 0.0
        %1508 = vmatpush1.msra.mxu0 %v1378
        %1509 = vmatprep.subr.mxu0 0.0
        %1510 = vmatpush1.msra.mxu0 %v1381
        %1511 = vmatprep.subr.mxu0 0.0
        %1512 = vmatpush1.msra.mxu0 %v1384
        %1513 = vmatprep.subr.mxu0 0.0
        %1514 = vmatpush1.msra.mxu0 %v1387
        %1515 = vmatprep.subr.mxu0 0.0
        %1516 = vmatpush1.msra.mxu0 %v1390
        %1517 = vmatprep.subr.mxu0 0.0
        %1518 = vmatpush1.msra.mxu0 %v1393
        %1519 = vmatprep.subr.mxu0 0.0
        %1520 = vmatpush1.msra.mxu0 %v1396
        %1521 = vmatprep.subr.mxu0 0.0
        %1522 = vmatpush1.msra.mxu0 %v1399
        %1523 = vmatprep.subr.mxu0 0.0
        %1524 = vmatpush1.msra.mxu0 %v1402
        %1525 = vmatprep.subr.mxu0 0.0
        %1526 = vmatpush1.msra.mxu0 %v1405
        %1527 = vmatprep.subr.mxu0 0.0
        %1528 = vmatpush1.msra.mxu0 %v1408
        %1529 = vmatprep.subr.mxu0 0.0
        %1530 = vmatpush1.msra.mxu0 0.0
        %1531 = vmatprep.subr.mxu0 0.0
        %1532 = vmatpush1.msra.mxu0 0.0
        %1533 = vmatprep.subr.mxu0 0.0
        %1534 = vmatpush1.msra.mxu0 0.0
        %1535 = vmatprep.subr.mxu0 0.0
        %1536 = vmatpush1.msra.mxu0 0.0
        %1537 = vmatprep.subr.mxu0 0.0
        %1538 = vmatpush1.msra.mxu0 0.0
        %1539 = vmatprep.subr.mxu0 0.0
        %1540 = vmatpush1.msra.mxu0 0.0
        %1541 = vmatprep.subr.mxu0 0.0
        %1542 = vmatpush1.msra.mxu0 0.0
        %1543 = vmatprep.subr.mxu0 0.0
        %1544 = vmatpush1.msra.mxu0 0.0
        %1545 = vmatprep.subr.mxu0 0.0
        %1546 = vmatpush1.msra.mxu0 0.0
        %1547 = vmatprep.subr.mxu0 0.0
        %1548 = vmatpush1.msra.mxu0 0.0
        %1549 = vmatprep.subr.mxu0 0.0
        %1550 = vmatpush1.msra.mxu0 0.0
        %1551 = vmatprep.subr.mxu0 0.0
        %1552 = vmatpush1.msra.mxu0 0.0
        %1553 = vmatprep.subr.mxu0 0.0
        %1554 = vmatpush1.msra.mxu0 0.0
        %1555 = vmatprep.subr.mxu0 0.0
        %1556 = vmatpush1.msra.mxu0 0.0
        %1557 = vmatprep.subr.mxu0 0.0
        %1558 = vmatpush1.msra.mxu0 0.0
        %1559 = vmatprep.subr.mxu0 0.0
        %1560 = vmatpush1.msra.mxu0 0.0
        %1561 = vmatprep.mubr.f32.mxu0 0.0
        %1562 = vmatmul.mubr.f32.gmra.mrb[0].mxu0 %v1356
        %v1563 = vpop.f32.mrb[0].mxu0
        %v1564 = vadd.f32 %v1422, %v1563
        %v1565 = vpop.f32.mrb[0].mxu0
        %1566 = vdwg.mxu0
        %v1567 = vld [vmem:[#allocation11] sm:$0xff]
        %v1568 = vld [vmem:[#allocation11 + $0x8] sm:$0xff]
        %v1569 = vld [vmem:[#allocation11 + $0x10] sm:$0xff]
        %v1570 = vld [vmem:[#allocation11 + $0x18] sm:$0xff]
        %v1571 = vld [vmem:[#allocation11 + $0x20] sm:$0xff]
        %v1572 = vld [vmem:[#allocation11 + $0x28] sm:$0xff]
        %v1573 = vld [vmem:[#allocation11 + $0x30] sm:$0xff]
        %v1574 = vld [vmem:[#allocation11 + $0x38] sm:$0xff]
        %v1575 = vld [vmem:[#allocation11 + $0x40] sm:$0xff]
        %v1576 = vld [vmem:[#allocation11 + $0x48] sm:$0xff]
        %v1577 = vld [vmem:[#allocation11 + $0x50] sm:$0xff]
        %v1578 = vld [vmem:[#allocation11 + $0x58] sm:$0xff]
        %v1579 = vld [vmem:[#allocation11 + $0x60] sm:$0xff]
        %v1580 = vld [vmem:[#allocation11 + $0x68] sm:$0xff]
        %v1581 = vld [vmem:[#allocation11 + $0x70] sm:$0xff]
        %v1582 = vld [vmem:[#allocation11 + $0x78] sm:$0xff]
        %v1583 = vld [vmem:[#allocation11 + $0x80] sm:$0xff]
        %v1584 = vld [vmem:[#allocation11 + $0x88] sm:$0xff]
        %v1585 = vld [vmem:[#allocation11 + $0x90] sm:$0xff]
        %v1586 = vld [vmem:[#allocation11 + $0x98] sm:$0xff]
        %v1587 = vld [vmem:[#allocation11 + $0xa0] sm:$0xff]
        %v1588 = vld [vmem:[#allocation11 + $0xa8] sm:$0xff]
        %v1589 = vld [vmem:[#allocation11 + $0xb0] sm:$0xff]
        %v1590 = vld [vmem:[#allocation11 + $0xb8] sm:$0xff]
        %v1591 = vld [vmem:[#allocation11 + $0xc0] sm:$0xff]
        %v1592 = vld [vmem:[#allocation11 + $0xc8] sm:$0xff]
        %v1593 = vld [vmem:[#allocation11 + $0xd0] sm:$0xff]
        %v1594 = vld [vmem:[#allocation11 + $0xd8] sm:$0xff]
        %v1595 = vld [vmem:[#allocation11 + $0xe0] sm:$0xff]
        %v1596 = vld [vmem:[#allocation11 + $0xe8] sm:$0xff]
        %v1597 = vld [vmem:[#allocation11 + $0xf0] sm:$0xff]
        %v1598 = vld [vmem:[#allocation11 + $0xf8] sm:$0xff]
        %v1599 = vld [vmem:[#allocation11 + $0x100] sm:$0xff]
        %v1600 = vld [vmem:[#allocation11 + $0x108] sm:$0xff]
        %v1601 = vld [vmem:[#allocation11 + $0x110] sm:$0xff]
        %v1602 = vld [vmem:[#allocation11 + $0x118] sm:$0xff]
        %v1603 = vld [vmem:[#allocation11 + $0x120] sm:$0xff]
        %v1604 = vld [vmem:[#allocation11 + $0x128] sm:$0xff]
        %v1605 = vld [vmem:[#allocation11 + $0x130] sm:$0xff]
        %v1606 = vld [vmem:[#allocation11 + $0x138] sm:$0xff]
        %v1607 = vld [vmem:[#allocation11 + $0x140] sm:$0xff]
        %v1608 = vld [vmem:[#allocation11 + $0x148] sm:$0xff]
        %v1609 = vld [vmem:[#allocation11 + $0x150] sm:$0xff]
        %v1610 = vld [vmem:[#allocation11 + $0x158] sm:$0xff]
        %v1611 = vld [vmem:[#allocation11 + $0x160] sm:$0xff]
        %v1612 = vld [vmem:[#allocation11 + $0x168] sm:$0xff]
        %v1613 = vld [vmem:[#allocation11 + $0x170] sm:$0xff]
        %v1614 = vld [vmem:[#allocation11 + $0x178] sm:$0xff]
        %s1615 = scalar_lea.vmem [#allocation12], 1
        %v1616 = vld [vmem:[%s1615] ss:$2 sm:$0x7]
        %v1618 = vlaneseq
        %v1619 = vshrl.u32 %v1618, 7
        %v1620 = vsub.s32 0, %v1619
        %v1621 = vrot.slane %v1616, %v1620
        %v1622 = vlaneseq
        %v1623 = vshrl.u32 %v1622, 7
        %v1624 = vsub.s32 1, %v1623
        %v1625 = vrot.slane %v1616, %v1624
        %v1626 = vlaneseq
        %v1627 = vshrl.u32 %v1626, 7
        %v1628 = vsub.s32 2, %v1627
        %v1629 = vrot.slane %v1616, %v1628
        %1633 = vmatprep.subr.mxu0 %v1568
        %1634 = vmatpush1.msra.mxu0 %v1567
        %1635 = vmatprep.subr.mxu0 %v1571
        %1636 = vmatpush1.msra.mxu0 %v1570
        %1637 = vmatprep.subr.mxu0 %v1574
        %1638 = vmatpush1.msra.mxu0 %v1573
        %1639 = vmatprep.subr.mxu0 %v1577
        %1640 = vmatpush1.msra.mxu0 %v1576
        %1641 = vmatprep.subr.mxu0 %v1580
        %1642 = vmatpush1.msra.mxu0 %v1579
        %1643 = vmatprep.subr.mxu0 %v1583
        %1644 = vmatpush1.msra.mxu0 %v1582
        %1645 = vmatprep.subr.mxu0 %v1586
        %1646 = vmatpush1.msra.mxu0 %v1585
        %1647 = vmatprep.subr.mxu0 %v1589
        %1648 = vmatpush1.msra.mxu0 %v1588
        %1649 = vmatprep.subr.mxu0 %v1592
        %1650 = vmatpush1.msra.mxu0 %v1591
        %1651 = vmatprep.subr.mxu0 %v1595
        %1652 = vmatpush1.msra.mxu0 %v1594
        %1653 = vmatprep.subr.mxu0 %v1598
        %1654 = vmatpush1.msra.mxu0 %v1597
        %1655 = vmatprep.subr.mxu0 %v1601
        %1656 = vmatpush1.msra.mxu0 %v1600
        %1657 = vmatprep.subr.mxu0 %v1604
        %1658 = vmatpush1.msra.mxu0 %v1603
        %1659 = vmatprep.subr.mxu0 %v1607
        %1660 = vmatpush1.msra.mxu0 %v1606
        %1661 = vmatprep.subr.mxu0 %v1610
        %1662 = vmatpush1.msra.mxu0 %v1609
        %1663 = vmatprep.subr.mxu0 %v1613
        %1664 = vmatpush1.msra.mxu0 %v1612
        %1665 = vmatprep.subr.mxu0 0.0
        %1666 = vmatpush1.msra.mxu0 0.0
        %1667 = vmatprep.subr.mxu0 0.0
        %1668 = vmatpush1.msra.mxu0 0.0
        %1669 = vmatprep.subr.mxu0 0.0
        %1670 = vmatpush1.msra.mxu0 0.0
        %1671 = vmatprep.subr.mxu0 0.0
        %1672 = vmatpush1.msra.mxu0 0.0
        %1673 = vmatprep.subr.mxu0 0.0
        %1674 = vmatpush1.msra.mxu0 0.0
        %1675 = vmatprep.subr.mxu0 0.0
        %1676 = vmatpush1.msra.mxu0 0.0
        %1677 = vmatprep.subr.mxu0 0.0
        %1678 = vmatpush1.msra.mxu0 0.0
        %1679 = vmatprep.subr.mxu0 0.0
        %1680 = vmatpush1.msra.mxu0 0.0
        %1681 = vmatprep.subr.mxu0 0.0
        %1682 = vmatpush1.msra.mxu0 0.0
        %1683 = vmatprep.subr.mxu0 0.0
        %1684 = vmatpush1.msra.mxu0 0.0
        %1685 = vmatprep.subr.mxu0 0.0
        %1686 = vmatpush1.msra.mxu0 0.0
        %1687 = vmatprep.subr.mxu0 0.0
        %1688 = vmatpush1.msra.mxu0 0.0
        %1689 = vmatprep.subr.mxu0 0.0
        %1690 = vmatpush1.msra.mxu0 0.0
        %1691 = vmatprep.subr.mxu0 0.0
        %1692 = vmatpush1.msra.mxu0 0.0
        %1693 = vmatprep.subr.mxu0 0.0
        %1694 = vmatpush1.msra.mxu0 0.0
        %1695 = vmatprep.subr.mxu0 0.0
        %1696 = vmatpush1.msra.mxu0 0.0
        %1697 = vmatprep.mubr.f32.mxu0 0.0
        %1698 = vmatmul.mubr.f32.gmra.mrb[0].mxu0 %v1360
        %v1699 = vpop.f32.mrb[0].mxu0
        %v1700 = vadd.f32 %v1621, %v1699
        %v1701 = vpop.f32.mrb[0].mxu0
        %v1702 = vadd.f32 %v1625, %v1701
        %1703 = vdwg.mxu0
        %1704 = vmatprep.subr.mxu0 0.0
        %1705 = vmatpush1.msra.mxu0 %v1569
        %1706 = vmatprep.subr.mxu0 0.0
        %1707 = vmatpush1.msra.mxu0 %v1572
        %1708 = vmatprep.subr.mxu0 0.0
        %1709 = vmatpush1.msra.mxu0 %v1575
        %1710 = vmatprep.subr.mxu0 0.0
        %1711 = vmatpush1.msra.mxu0 %v1578
        %1712 = vmatprep.subr.mxu0 0.0
        %1713 = vmatpush1.msra.mxu0 %v1581
        %1714 = vmatprep.subr.mxu0 0.0
        %1715 = vmatpush1.msra.mxu0 %v1584
        %1716 = vmatprep.subr.mxu0 0.0
        %1717 = vmatpush1.msra.mxu0 %v1587
        %1718 = vmatprep.subr.mxu0 0.0
        %1719 = vmatpush1.msra.mxu0 %v1590
        %1720 = vmatprep.subr.mxu0 0.0
        %1721 = vmatpush1.msra.mxu0 %v1593
        %1722 = vmatprep.subr.mxu0 0.0
        %1723 = vmatpush1.msra.mxu0 %v1596
        %1724 = vmatprep.subr.mxu0 0.0
        %1725 = vmatpush1.msra.mxu0 %v1599
        %1726 = vmatprep.subr.mxu0 0.0
        %1727 = vmatpush1.msra.mxu0 %v1602
        %1728 = vmatprep.subr.mxu0 0.0
        %1729 = vmatpush1.msra.mxu0 %v1605
        %1730 = vmatprep.subr.mxu0 0.0
        %1731 = vmatpush1.msra.mxu0 %v1608
        %1732 = vmatprep.subr.mxu0 0.0
        %1733 = vmatpush1.msra.mxu0 %v1611
        %1734 = vmatprep.subr.mxu0 0.0
        %1735 = vmatpush1.msra.mxu0 %v1614
        %1736 = vmatprep.subr.mxu0 0.0
        %1737 = vmatpush1.msra.mxu0 0.0
        %1738 = vmatprep.subr.mxu0 0.0
        %1739 = vmatpush1.msra.mxu0 0.0
        %1740 = vmatprep.subr.mxu0 0.0
        %1741 = vmatpush1.msra.mxu0 0.0
        %1742 = vmatprep.subr.mxu0 0.0
        %1743 = vmatpush1.msra.mxu0 0.0
        %1744 = vmatprep.subr.mxu0 0.0
        %1745 = vmatpush1.msra.mxu0 0.0
        %1746 = vmatprep.subr.mxu0 0.0
        %1747 = vmatpush1.msra.mxu0 0.0
        %1748 = vmatprep.subr.mxu0 0.0
        %1749 = vmatpush1.msra.mxu0 0.0
        %1750 = vmatprep.subr.mxu0 0.0
        %1751 = vmatpush1.msra.mxu0 0.0
        %1752 = vmatprep.subr.mxu0 0.0
        %1753 = vmatpush1.msra.mxu0 0.0
        %1754 = vmatprep.subr.mxu0 0.0
        %1755 = vmatpush1.msra.mxu0 0.0
        %1756 = vmatprep.subr.mxu0 0.0
        %1757 = vmatpush1.msra.mxu0 0.0
        %1758 = vmatprep.subr.mxu0 0.0
        %1759 = vmatpush1.msra.mxu0 0.0
        %1760 = vmatprep.subr.mxu0 0.0
        %1761 = vmatpush1.msra.mxu0 0.0
        %1762 = vmatprep.subr.mxu0 0.0
        %1763 = vmatpush1.msra.mxu0 0.0
        %1764 = vmatprep.subr.mxu0 0.0
        %1765 = vmatpush1.msra.mxu0 0.0
        %1766 = vmatprep.subr.mxu0 0.0
        %1767 = vmatpush1.msra.mxu0 0.0
        %1768 = vmatprep.mubr.f32.mxu0 0.0
        %1769 = vmatmul.mubr.f32.gmra.mrb[0].mxu0 %v1360
        %v1770 = vpop.f32.mrb[0].mxu0
        %v1771 = vadd.f32 %v1629, %v1770
        %v1772 = vpop.f32.mrb[0].mxu0
        %1773 = vdwg.mxu0
        %v1774 = vadd.f32 %v1493, %v1700
        %v1775 = vxor.u32 %v1774, 2147483648
        %v1776 = vmul.f32 %v1775, 1.442695
        %v1777 = vpow.pop %v1776
        %v1778 = vadd.f32 %v1777, 1.0
        %v1779 = vrcp.pop %v1778
        %v1780 = vmul.f32 1.0, %v1779
        %v1781 = vadd.f32 %v1495, %v1702
        %v1782 = vxor.u32 %v1781, 2147483648
        %v1783 = vmul.f32 %v1782, 1.442695
        %v1784 = vpow.pop %v1783
        %v1785 = vadd.f32 %v1784, 1.0
        %v1786 = vrcp.pop %v1785
        %v1787 = vmul.f32 1.0, %v1786
        %v1788 = vmul.f32 %v1780, %v1771
        %v1789 = vadd.f32 %v1564, %v1788
        %v1790 = vtanh.pop %v1789
        %v1791 = vsub.f32 1.0, %v1787
        %v1792 = vmul.f32 %v1791, %v1790
        %v1793 = vmul.f32 %v1787, %v1360
        %v1794 = vadd.f32 %v1792, %v1793
        %1795 = vst [vmem:[%s1358] sm:$0xff] %v1794
        %v1796 = vld [vmem:[#allocation14] sm:$0xff]
        %v1797 = vld [vmem:[#allocation14 + $0x8] sm:$0xff]
        %v1798 = vld [vmem:[#allocation14 + $0x10] sm:$0xff]
        %v1799 = vld [vmem:[#allocation14 + $0x18] sm:$0xff]
        %v1800 = vld [vmem:[#allocation14 + $0x20] sm:$0xff]
        %v1801 = vld [vmem:[#allocation14 + $0x28] sm:$0xff]
        %v1802 = vld [vmem:[#allocation14 + $0x30] sm:$0xff]
        %v1803 = vld [vmem:[#allocation14 + $0x38] sm:$0xff]
        %v1804 = vld [vmem:[#allocation14 + $0x40] sm:$0xff]
        %v1805 = vld [vmem:[#allocation14 + $0x48] sm:$0xff]
        %v1806 = vld [vmem:[#allocation14 + $0x50] sm:$0xff]
        %v1807 = vld [vmem:[#allocation14 + $0x58] sm:$0xff]
        %v1808 = vld [vmem:[#allocation14 + $0x60] sm:$0xff]
        %v1809 = vld [vmem:[#allocation14 + $0x68] sm:$0xff]
        %v1810 = vld [vmem:[#allocation14 + $0x70] sm:$0xff]
        %v1811 = vld [vmem:[#allocation14 + $0x78] sm:$0xff]
        %v1812 = vld [vmem:[#allocation14 + $0x80] sm:$0xff]
        %v1813 = vld [vmem:[#allocation14 + $0x88] sm:$0xff]
        %v1814 = vld [vmem:[#allocation14 + $0x90] sm:$0xff]
        %v1815 = vld [vmem:[#allocation14 + $0x98] sm:$0xff]
        %v1816 = vld [vmem:[#allocation14 + $0xa0] sm:$0xff]
        %v1817 = vld [vmem:[#allocation14 + $0xa8] sm:$0xff]
        %v1818 = vld [vmem:[#allocation14 + $0xb0] sm:$0xff]
        %v1819 = vld [vmem:[#allocation14 + $0xb8] sm:$0xff]
        %v1820 = vld [vmem:[#allocation14 + $0xc0] sm:$0xff]
        %v1821 = vld [vmem:[#allocation14 + $0xc8] sm:$0xff]
        %v1822 = vld [vmem:[#allocation14 + $0xd0] sm:$0xff]
        %v1823 = vld [vmem:[#allocation14 + $0xd8] sm:$0xff]
        %v1824 = vld [vmem:[#allocation14 + $0xe0] sm:$0xff]
        %v1825 = vld [vmem:[#allocation14 + $0xe8] sm:$0xff]
        %v1826 = vld [vmem:[#allocation14 + $0xf0] sm:$0xff]
        %v1827 = vld [vmem:[#allocation14 + $0xf8] sm:$0xff]
        %v1828 = vld [vmem:[%s11] sm:$0x3]
        %v1830 = vlaneseq
        %v1831 = vshrl.u32 %v1830, 7
        %v1832 = vsub.s32 0, %v1831
        %v1833 = vrot.slane %v1828, %v1832
        %v1834 = vlaneseq
        %v1835 = vshrl.u32 %v1834, 7
        %v1836 = vsub.s32 1, %v1835
        %v1837 = vrot.slane %v1828, %v1836
        %1840 = vmatprep.subr.mxu0 %v1797
        %1841 = vmatpush1.msra.mxu0 %v1796
        %1842 = vmatprep.subr.mxu0 %v1799
        %1843 = vmatpush1.msra.mxu0 %v1798
        %1844 = vmatprep.subr.mxu0 %v1801
        %1845 = vmatpush1.msra.mxu0 %v1800
        %1846 = vmatprep.subr.mxu0 %v1803
        %1847 = vmatpush1.msra.mxu0 %v1802
        %1848 = vmatprep.subr.mxu0 %v1805
        %1849 = vmatpush1.msra.mxu0 %v1804
        %1850 = vmatprep.subr.mxu0 %v1807
        %1851 = vmatpush1.msra.mxu0 %v1806
        %1852 = vmatprep.subr.mxu0 %v1809
        %1853 = vmatpush1.msra.mxu0 %v1808
        %1854 = vmatprep.subr.mxu0 %v1811
        %1855 = vmatpush1.msra.mxu0 %v1810
        %1856 = vmatprep.subr.mxu0 %v1813
        %1857 = vmatpush1.msra.mxu0 %v1812
        %1858 = vmatprep.subr.mxu0 %v1815
        %1859 = vmatpush1.msra.mxu0 %v1814
        %1860 = vmatprep.subr.mxu0 %v1817
        %1861 = vmatpush1.msra.mxu0 %v1816
        %1862 = vmatprep.subr.mxu0 %v1819
        %1863 = vmatpush1.msra.mxu0 %v1818
        %1864 = vmatprep.subr.mxu0 %v1821
        %1865 = vmatpush1.msra.mxu0 %v1820
        %1866 = vmatprep.subr.mxu0 %v1823
        %1867 = vmatpush1.msra.mxu0 %v1822
        %1868 = vmatprep.subr.mxu0 %v1825
        %1869 = vmatpush1.msra.mxu0 %v1824
        %1870 = vmatprep.subr.mxu0 %v1827
        %1871 = vmatpush1.msra.mxu0 %v1826
        %1872 = vmatprep.subr.mxu0 0.0
        %1873 = vmatpush1.msra.mxu0 0.0
        %1874 = vmatprep.subr.mxu0 0.0
        %1875 = vmatpush1.msra.mxu0 0.0
        %1876 = vmatprep.subr.mxu0 0.0
        %1877 = vmatpush1.msra.mxu0 0.0
        %1878 = vmatprep.subr.mxu0 0.0
        %1879 = vmatpush1.msra.mxu0 0.0
        %1880 = vmatprep.subr.mxu0 0.0
        %1881 = vmatpush1.msra.mxu0 0.0
        %1882 = vmatprep.subr.mxu0 0.0
        %1883 = vmatpush1.msra.mxu0 0.0
        %1884 = vmatprep.subr.mxu0 0.0
        %1885 = vmatpush1.msra.mxu0 0.0
        %1886 = vmatprep.subr.mxu0 0.0
        %1887 = vmatpush1.msra.mxu0 0.0
        %1888 = vmatprep.subr.mxu0 0.0
        %1889 = vmatpush1.msra.mxu0 0.0
        %1890 = vmatprep.subr.mxu0 0.0
        %1891 = vmatpush1.msra.mxu0 0.0
        %1892 = vmatprep.subr.mxu0 0.0
        %1893 = vmatpush1.msra.mxu0 0.0
        %1894 = vmatprep.subr.mxu0 0.0
        %1895 = vmatpush1.msra.mxu0 0.0
        %1896 = vmatprep.subr.mxu0 0.0
        %1897 = vmatpush1.msra.mxu0 0.0
        %1898 = vmatprep.subr.mxu0 0.0
        %1899 = vmatpush1.msra.mxu0 0.0
        %1900 = vmatprep.subr.mxu0 0.0
        %1901 = vmatpush1.msra.mxu0 0.0
        %1902 = vmatprep.subr.mxu0 0.0
        %1903 = vmatpush1.msra.mxu0 0.0
        %1904 = vmatprep.mubr.f32.mxu0 0.0
        %1905 = vmatmul.mubr.f32.gmra.mrb[0].mxu0 %v1794
        %v1906 = vpop.f32.mrb[0].mxu0
        %v1907 = vadd.f32 %v1833, %v1906
        %v1908 = vpop.f32.mrb[0].mxu0
        %v1909 = vadd.f32 %v1837, %v1908
        %1910 = vdwg.mxu0
        %1911 = vst [vmem:[%s526] sm:$0xff] %v1907
        %1912 = vst [vmem:[%s526 + $0x8] sm:$0xff] %v1909
        %s1913 = sand.u32 %s298, 1
        %s1914 = scalar_lea.sflag [#allocation5], %s1913
        %s1915 = sand.u32 %s298, 1
        %s1916 = smul.addr %s1915, 16
        %s1917 = scalar_lea.vmem [#allocation15], %s1916
        // Predicated region
        $region101: #{decoder_decode.1} parent=67 // pred_check
          %p1918 = pneg %p308
        $region102: #{decoder_decode.1} parent=67 // pred_check_branch
          %1920 = sbr.rel (%p1918) target = $region104
        $region103: #{decoder_decode.1} parent=67 // pred_region
          %s1922 = ssub.s32 256, 256
          %1923 = vsyncadd %s1914, %s1922
          %s1924 = smul.addr %s33, 2
          %s1925 = smul.addr %s1924, 128
          %s1926 = scalar_lea.hbm %s12, %s1925
          %s1928 = sshll.u32 %s1917, 4
          %s1929 = int_to_ptr.vmem [resolvable:$true] %s1928
          %1931 = dma.vmem_to_hbm [thread:$0]  %s1929, 256, %s1926, %s1914
        $region104: #{decoder_decode.1} parent=67 // pred_fallthru
          _
        // Predicated region
        $region105: #{decoder_decode.1} parent=67 // pred_check
          %p1932 = pneg %p329
        $region106: #{decoder_decode.1} parent=67 // pred_check_branch
          %1934 = sbr.rel (%p1932) target = $region108
        $region107: #{decoder_decode.1} parent=67 // pred_region
          %s1936 = ssub.s32 256, 256
          %1937 = vsyncadd [#allocation17], %s1936
          %s1938 = sshll.u32 [#allocation16], 4
          %s1939 = int_to_ptr.vmem [resolvable:$true] %s1938
          %1944 = dma.vmem_to_hbm [thread:$0]  %s1939, 256, %s13, [#allocation17], 128, 128, 8
        $region108: #{decoder_decode.1} parent=67 // pred_fallthru
          _
        // Predicated region
        $region109: #{decoder_decode.1} parent=67 // pred_check
          %p1945 = pneg %p329
        $region110: #{decoder_decode.1} parent=67 // pred_check_branch
          %1947 = sbr.rel (%p1945) target = $region112
        $region111: #{decoder_decode.1} parent=67 // pred_region
          %1948 = dma.done [#allocation17], 256
        $region112: #{decoder_decode.1} parent=67 // pred_fallthru
          _
      $region68: #{decoder_decode.1} parent=5 // pred_fallthru
        _
      %p1949 = scmp.le.s32.totalorder 2, %s28
      // Predicated region
      $region113: #{decoder_decode.1} parent=5 // pred_check
        %p1950 = pneg %p1949
      $region114: #{decoder_decode.1} parent=5 // pred_check_branch
        %1952 = sbr.rel (%p1950) target = $region116
      $region115: #{decoder_decode.1} parent=5 // pred_region
        %s1953 = ssub.s32 %s28, 2
        // Predicated region
        $region117: #{decoder_decode.1} parent=115 // pred_check
          %p1954 = pneg %p314
        $region118: #{decoder_decode.1} parent=115 // pred_check_branch
          %1956 = sbr.rel (%p1954) target = $region120
        $region119: #{decoder_decode.1} parent=115 // pred_region
          %s1957 = sand.u32 %s299, 1
          %s1958 = scalar_lea.sflag [#allocation5], %s1957
          %s1959 = sand.u32 %s299, 1
          %s1960 = smul.addr %s1959, 16
          %s1961 = scalar_lea.vmem [#allocation15], %s1960
          %1962 = dma.done %s1958, 256
        $region120: #{decoder_decode.1} parent=115 // pred_fallthru
          _
      $region116: #{decoder_decode.1} parent=5 // pred_fallthru
        _
    $region6: #{decoder_decode.1} parent=1 // loop_footer
      %s32 = sadd.s32 1, %s28
    $region7: #{decoder_decode.1} parent=1 // loop_footer_branch
      %27 = sbr.rel target = $region3
    $region8: #{decoder_decode.1} parent=1 // loop_exit
      _
    %1963 = vsyncpa [#allocation4], 1
    %s1964 = scalar_lea.sflag [#allocation4], 1
    %1965 = vsyncpa %s1964, 1
    %1966 = vsyncpa [#allocation7], 1
    %1967 = vsyncpa [#allocation10], 1
    %1968 = vsyncpa [#allocation13], 1
    %1969 = vsyncpa [#allocation5], 1
    %s1970 = scalar_lea.sflag [#allocation5], 1
    %1971 = vsyncpa %s1970, 1
    %1972 = vsyncpa [#allocation17], 1

</llo_original>
